<compile_context>
chip_gen: v6e
topology: v6e:2x2x1
jax: 0.10.0
libtpu: 0.0.40
codegen_flags: <defaults>
</compile_context>

<pallas_src>
import functools

import jax
import jax.numpy as jnp
from jax import lax
from jax.experimental import pallas as pl
from jax.experimental.pallas import tpu as pltpu


def _silu(x):
    return x / (1.0 + jnp.exp(-x))


def _softplus(x):
    # numerically stable log(1 + exp(x)) using only exp/log/abs/max
    return jnp.maximum(x, 0.0) + jnp.log(1.0 + jnp.exp(-jnp.abs(x)))


# --------------------------------------------------------------------------- #
# Kernel 1: in_proj + causal depthwise conv + SiLU + B/C/Delta projections
# --------------------------------------------------------------------------- #
def _mamba_pre_kernel(seq_ref, w_in_a_ref, w_in_z_ref, conv_w_ref, conv_b_ref,
                      w_b_ref, w_c_ref, w_d1_ref, w_d2_ref, d_param_ref,
                      a_act_ref, z_act_ref, delta_ref, b_out_ref, c_out_ref,
                      apad_ref, *, seq_len, d_model, ker_size):
    f32 = jnp.float32
    x = seq_ref[...].astype(f32)                                    # (l, d_in)

    a_pre = jnp.dot(x, w_in_a_ref[...].astype(f32),
                    preferred_element_type=f32)                     # (l, d_model)
    z = jnp.dot(x, w_in_z_ref[...].astype(f32),
                preferred_element_type=f32)                         # (l, d_model)

    # Causal depthwise conv1d: zero-left-padded VMEM scratch, K static taps.
    apad_ref[0:ker_size - 1, :] = jnp.zeros((ker_size - 1, d_model), f32)
    apad_ref[ker_size - 1:ker_size - 1 + seq_len, :] = a_pre

    conv_w = conv_w_ref[...].astype(f32)                            # (K, d_model)
    acc = jnp.zeros((seq_len, d_model), f32)
    for k in range(ker_size):                                       # K static & tiny
        acc = acc + conv_w[k:k + 1, :] * apad_ref[k:k + seq_len, :]
    a_conv = acc + conv_b_ref[...].astype(f32)
    a_act = _silu(a_conv)                                           # (l, d_model)

    # Input-dependent SSM projections.
    b_mat = jnp.dot(a_act, w_b_ref[...].astype(f32), preferred_element_type=f32)
    c_mat = jnp.dot(a_act, w_c_ref[...].astype(f32), preferred_element_type=f32)
    d_lo = jnp.dot(a_act, w_d1_ref[...].astype(f32), preferred_element_type=f32)
    d_hi = jnp.dot(d_lo, w_d2_ref[...].astype(f32), preferred_element_type=f32)
    delta = _softplus(d_param_ref[...].astype(f32) + d_hi)          # (l, d_model)

    a_act_ref[...] = a_act.astype(a_act_ref.dtype)
    z_act_ref[...] = _silu(z).astype(z_act_ref.dtype)
    delta_ref[...] = delta.astype(delta_ref.dtype)
    b_out_ref[...] = b_mat.astype(b_out_ref.dtype)
    c_out_ref[...] = c_mat.astype(c_out_ref.dtype)


# --------------------------------------------------------------------------- #
# Kernel 2: sequential selective scan + D skip + gating + out_proj
# --------------------------------------------------------------------------- #
def _mamba_scan_kernel(a_act_ref, z_act_ref, delta_ref, b_exp_ref, c_ref,
                       a_param_t_ref, d_param_ref, w_out_ref, out_ref,
                       h_ref, y_ref, *, seq_len):
    f32 = jnp.float32
    exp_a = jnp.exp(-a_param_t_ref[...].astype(f32))    # (d_state, d_model) == exp(A).T
    d_row = d_param_ref[...].astype(f32)                 # (1, d_model)

    h_ref[...] = jnp.zeros_like(h_ref)                   # state: (d_state, d_model)

    def body(t, carry):
        dlt = delta_ref[pl.ds(t, 1), :]                  # (1, d_model)
        a_t = a_act_ref[pl.ds(t, 1), :]                  # (1, d_model)
        c_t = c_ref[pl.ds(t, 1), :]                      # (1, d_state)
        b_col = b_exp_ref[t]                             # (d_state, 1)

        a_bar = exp_a * dlt                              # (d_state, d_model)
        x_bar = b_col * (dlt * a_t)                      # (d_state, d_model)
        h = a_bar * h_ref[...] + x_bar
        h_ref[...] = h
        # y_t[d] = sum_s C_t[s] h[s, d]  -> one small MXU matvec, + D*x skip
        y_ref[pl.ds(t, 1), :] = (jnp.dot(c_t, h, preferred_element_type=f32)
                                 + d_row * a_t)
        return carry

    lax.fori_loop(0, seq_len, body, 0)

    gated = y_ref[...] * z_act_ref[...]                  # (l, d_model)
    out_ref[...] = jnp.dot(gated, w_out_ref[...].astype(f32),
                           preferred_element_type=f32).astype(out_ref.dtype)


# --------------------------------------------------------------------------- #
# Wrapper
# --------------------------------------------------------------------------- #
def mamba_block_forward(seq, params, *, interpret=False):
    b, l, d_in = seq.shape
    d_model = params["w_in_a"].shape[1]
    d_state = params["w_B"].shape[1]
    d_discr = params["w_D1"].shape[1]
    ker = params["conv_w"].shape[0]
    f32 = jnp.float32

    cparams = pltpu.CompilerParams(
        dimension_semantics=("parallel",),
        vmem_limit_bytes=32 * 1024 * 1024,   # explicit limit (covers v5e's 16 MiB scoped default)
    )

    pre = pl.pallas_call(
        functools.partial(_mamba_pre_kernel, seq_len=l, d_model=d_model,
                          ker_size=ker),
        out_shape=(
            jax.ShapeDtypeStruct((b, l, d_model), f32),   # a_act (post conv + SiLU)
            jax.ShapeDtypeStruct((b, l, d_model), f32),   # silu(z) gate branch
            jax.ShapeDtypeStruct((b, l, d_model), f32),   # delta
            jax.ShapeDtypeStruct((b, l, d_state), f32),   # B
            jax.ShapeDtypeStruct((b, l, d_state), f32),   # C
        ),
        grid=(b,),
        in_specs=[
            pl.BlockSpec((None, l, d_in), lambda i: (i, 0, 0)),
            pl.BlockSpec((d_in, d_model), lambda i: (0, 0)),
            pl.BlockSpec((d_in, d_model), lambda i: (0, 0)),
            pl.BlockSpec((ker, d_model), lambda i: (0, 0)),
            pl.BlockSpec((1, d_model), lambda i: (0, 0)),
            pl.BlockSpec((d_model, d_state), lambda i: (0, 0)),
            pl.BlockSpec((d_model, d_state), lambda i: (0, 0)),
            pl.BlockSpec((d_model, d_discr), lambda i: (0, 0)),
            pl.BlockSpec((d_discr, d_model), lambda i: (0, 0)),
            pl.BlockSpec((1, d_model), lambda i: (0, 0)),
        ],
        out_specs=(
            pl.BlockSpec((None, l, d_model), lambda i: (i, 0, 0)),
            pl.BlockSpec((None, l, d_model), lambda i: (i, 0, 0)),
            pl.BlockSpec((None, l, d_model), lambda i: (i, 0, 0)),
            pl.BlockSpec((None, l, d_state), lambda i: (i, 0, 0)),
            pl.BlockSpec((None, l, d_state), lambda i: (i, 0, 0)),
        ),
        scratch_shapes=[pltpu.VMEM((l + ker - 1, d_model), f32)],
        compiler_params=cparams,
        interpret=interpret,
    )(seq, params["w_in_a"], params["w_in_z"], params["conv_w"],
      params["conv_b"].reshape(1, d_model),
      params["w_B"], params["w_C"], params["w_D1"], params["w_D2"],
      params["D"].reshape(1, d_model))

    a_act, z_act, delta, b_mat, c_mat = pre

    # Tiny wrapper-side layout plumbing (no large copies):
    b_exp = b_mat[..., None]                  # (b, l, d_state, 1): per-step columns
    a_param_t = jnp.transpose(params["A"])    # (d_state, d_model)

    out = pl.pallas_call(
        functools.partial(_mamba_scan_kernel, seq_len=l),
        out_shape=jax.ShapeDtypeStruct((b, l, d_in), seq.dtype),
        grid=(b,),
        in_specs=[
            pl.BlockSpec((None, l, d_model), lambda i: (i, 0, 0)),      # a_act
            pl.BlockSpec((None, l, d_model), lambda i: (i, 0, 0)),      # silu(z)
            pl.BlockSpec((None, l, d_model), lambda i: (i, 0, 0)),      # delta
            pl.BlockSpec((None, l, d_state, 1), lambda i: (i, 0, 0, 0)),  # B columns
            pl.BlockSpec((None, l, d_state), lambda i: (i, 0, 0)),      # C
            pl.BlockSpec((d_state, d_model), lambda i: (0, 0)),         # A^T
            pl.BlockSpec((1, d_model), lambda i: (0, 0)),               # D
            pl.BlockSpec((d_model, d_in), lambda i: (0, 0)),            # W_out
        ],
        out_specs=pl.BlockSpec((None, l, d_in), lambda i: (i, 0, 0)),
        scratch_shapes=[pltpu.VMEM((d_state, d_model), f32),   # SSM state
                        pltpu.VMEM((l, d_model), f32)],        # per-step y rows
        compiler_params=cparams,
        interpret=interpret,
    )(a_act, z_act, delta, b_exp, c_mat, a_param_t,
      params["D"].reshape(1, d_model), params["w_out"])

    return out


# --------------------------------------------------------------------------- #
# Pure-JAX reference (mirrors the PyTorch MambaBlock.forward exactly)
# --------------------------------------------------------------------------- #
def mamba_block_ref(seq, params):
    hp = jax.lax.Precision.HIGHEST
    a = jnp.einsum("bld,dm->blm", seq, params["w_in_a"], precision=hp)
    z = jnp.einsum("bld,dm->blm", seq, params["w_in_z"], precision=hp)
    ker = params["conv_w"].shape[0]
    l = seq.shape[1]
    a_pad = jnp.pad(a, ((0, 0), (ker - 1, 0), (0, 0)))
    a_conv = params["conv_b"][None, None, :]
    for k in range(ker):
        a_conv = a_conv + params["conv_w"][k][None, None, :] * a_pad[:, k:k + l, :]
    a_act = a_conv * jax.nn.sigmoid(a_conv)
    B = jnp.einsum("blm,ms->bls", a_act, params["w_B"], precision=hp)
    C = jnp.einsum("blm,ms->bls", a_act, params["w_C"], precision=hp)
    d_lo = jnp.einsum("blm,mr->blr", a_act, params["w_D1"], precision=hp)
    d_hi = jnp.einsum("blr,rm->blm", d_lo, params["w_D2"], precision=hp)
    delta = jax.nn.softplus(params["D"][None, None, :] + d_hi)
    exp_a = jnp.exp(-params["A"])                                   # (d_model, d_state)

    def step(h, xs):
        a_t, d_t, b_t, c_t = xs
        a_bar = exp_a[None, :, :] * d_t[:, :, None]
        x_bar = b_t[:, None, :] * d_t[:, :, None] * a_t[:, :, None]
        h = a_bar * h + x_bar
        y = jnp.einsum("bds,bs->bd", h, c_t, precision=hp)
        return h, y

    bsz = seq.shape[0]
    h0 = jnp.zeros((bsz,) + params["A"].shape, jnp.float32)
    xs = (jnp.swapaxes(a_act, 0, 1), jnp.swapaxes(delta, 0, 1),
          jnp.swapaxes(B, 0, 1), jnp.swapaxes(C, 0, 1))
    _, ys = jax.lax.scan(step, h0, xs)
    y = jnp.swapaxes(ys, 0, 1) + params["D"][None, None, :] * a_act
    out = jnp.einsum("blm,md->bld", y * (z * jax.nn.sigmoid(z)),
                     params["w_out"], precision=hp)
    return out


if __name__ == "__main__":
    # Small shapes consistent with MambaBlock(d_input=32, d_model=32, d_state=16, ker_size=4)
    batch, seq_len = 2, 8
    d_input, d_model, d_state, ker = 32, 32, 16, 4
    d_discr = d_model // 16

    key = jax.random.PRNGKey(0)
    keys = jax.random.split(key, 10)

    def _lin(k, fan_in, shape):
        bound = 1.0 / (fan_in ** 0.5)
        w = jax.random.uniform(k, shape, jnp.float32, -bound, bound)
        # keep values bf16-representable so kernel/reference matmul paths agree tightly
        return w.astype(jnp.bfloat16).astype(jnp.float32)

    params = {
        "w_in_a": _lin(keys[0], d_input, (d_input, d_model)),
        "w_in_z": _lin(keys[1], d_input, (d_input, d_model)),
        "w_out":  _lin(keys[2], d_model, (d_model, d_input)),
        "w_B":    _lin(keys[3], d_model, (d_model, d_state)),
        "w_C":    _lin(keys[4], d_model, (d_model, d_state)),
        "w_D1":   _lin(keys[5], d_model, (d_model, d_discr)),
        "w_D2":   _lin(keys[6], d_discr, (d_discr, d_model)),
        "conv_w": _lin(keys[7], ker, (ker, d_model)),        # depthwise taps, (K, d_model)
        "conv_b": _lin(keys[8], ker, (d_model,)),
        "A": jnp.tile(jnp.arange(1, d_state + 1, dtype=jnp.float32)[None, :],
                      (d_model, 1)),
        "D": jnp.ones((d_model,), jnp.float32),
    }

    seq = jax.random.normal(keys[9], (batch, seq_len, d_input), jnp.float32)
    seq = seq.astype(jnp.bfloat16).astype(jnp.float32)

    out = jax.jit(mamba_block_forward)(seq, params)
    out = jax.block_until_ready(out)

    ref = mamba_block_ref(seq, params)
    assert out.shape == (batch, seq_len, d_input)
    assert bool(jnp.allclose(out, ref, atol=1e-2, rtol=1e-2)), "mismatch vs reference"

    print("KERNEL_OK")
</pallas_src>

<mosaic_0001>
module attributes {stable_mosaic.version = 11 : i64} {
  func.func @_mamba_pre_kernel(%arg0: i32, %arg1: memref<1x8x32xf32, #tpu.memory_space<vmem>>, %arg2: memref<32x32xf32, #tpu.memory_space<vmem>>, %arg3: memref<32x32xf32, #tpu.memory_space<vmem>>, %arg4: memref<4x32xf32, #tpu.memory_space<vmem>>, %arg5: memref<1x32xf32, #tpu.memory_space<vmem>>, %arg6: memref<32x16xf32, #tpu.memory_space<vmem>>, %arg7: memref<32x16xf32, #tpu.memory_space<vmem>>, %arg8: memref<32x2xf32, #tpu.memory_space<vmem>>, %arg9: memref<2x32xf32, #tpu.memory_space<vmem>>, %arg10: memref<1x32xf32, #tpu.memory_space<vmem>>, %arg11: memref<1x8x32xf32, #tpu.memory_space<vmem>>, %arg12: memref<1x8x32xf32, #tpu.memory_space<vmem>>, %arg13: memref<1x8x32xf32, #tpu.memory_space<vmem>>, %arg14: memref<1x8x16xf32, #tpu.memory_space<vmem>>, %arg15: memref<1x8x16xf32, #tpu.memory_space<vmem>>, %arg16: memref<11x32xf32, #tpu.memory_space<vmem>>) attributes {dimension_semantics = [#tpu.dimension_semantics<parallel>], iteration_bounds = array<i64: 2>, scalar_prefetch = 0 : i64, scratch_operands = 1 : i64, tpu.core_type = #tpu.core_type<tc>, window_params = [{transform_indices = @transform_0, window_bounds = array<i64: 1, 8, 32>}, {pipeline_mode = #tpu.pipeline_mode<synchronous>, transform_indices = @transform_1, window_bounds = array<i64: 32, 32>}, {pipeline_mode = #tpu.pipeline_mode<synchronous>, transform_indices = @transform_2, window_bounds = array<i64: 32, 32>}, {pipeline_mode = #tpu.pipeline_mode<synchronous>, transform_indices = @transform_3, window_bounds = array<i64: 4, 32>}, {pipeline_mode = #tpu.pipeline_mode<synchronous>, transform_indices = @transform_4, window_bounds = array<i64: 1, 32>}, {pipeline_mode = #tpu.pipeline_mode<synchronous>, transform_indices = @transform_5, window_bounds = array<i64: 32, 16>}, {pipeline_mode = #tpu.pipeline_mode<synchronous>, transform_indices = @transform_6, window_bounds = array<i64: 32, 16>}, {pipeline_mode = #tpu.pipeline_mode<synchronous>, transform_indices = @transform_7, window_bounds = array<i64: 32, 2>}, {pipeline_mode = #tpu.pipeline_mode<synchronous>, transform_indices = @transform_8, window_bounds = array<i64: 2, 32>}, {pipeline_mode = #tpu.pipeline_mode<synchronous>, transform_indices = @transform_9, window_bounds = array<i64: 1, 32>}, {transform_indices = @transform_10, window_bounds = array<i64: 1, 8, 32>}, {transform_indices = @transform_11, window_bounds = array<i64: 1, 8, 32>}, {transform_indices = @transform_12, window_bounds = array<i64: 1, 8, 32>}, {transform_indices = @transform_13, window_bounds = array<i64: 1, 8, 16>}, {transform_indices = @transform_14, window_bounds = array<i64: 1, 8, 16>}]} {
    %c0 = arith.constant 0 : index
    %c0_0 = arith.constant 0 : index
    %c0_1 = arith.constant 0 : index
    %0 = vector.load %arg1[%c0, %c0_0, %c0_1] : memref<1x8x32xf32, #tpu.memory_space<vmem>>, vector<1x8x32xf32>
    %1 = vector.shape_cast %0 : vector<1x8x32xf32> to vector<8x32xf32>
    %c0_2 = arith.constant 0 : index
    %c0_3 = arith.constant 0 : index
    %2 = vector.load %arg2[%c0_2, %c0_3] : memref<32x32xf32, #tpu.memory_space<vmem>>, vector<32x32xf32>
    %cst = arith.constant dense<0.000000e+00> : vector<8x32xf32>
    %3 = tpu.matmul %1, %2, %cst {dimension_numbers = #tpu.dot_dimension_numbers<[1], [0], [0], [1], [0, 0, 1, 1], [], []>} : vector<8x32xf32>, vector<32x32xf32>, vector<8x32xf32> -> vector<8x32xf32>
    %c0_4 = arith.constant 0 : index
    %c0_5 = arith.constant 0 : index
    %4 = vector.load %arg3[%c0_4, %c0_5] : memref<32x32xf32, #tpu.memory_space<vmem>>, vector<32x32xf32>
    %cst_6 = arith.constant dense<0.000000e+00> : vector<8x32xf32>
    %5 = tpu.matmul %1, %4, %cst_6 {dimension_numbers = #tpu.dot_dimension_numbers<[1], [0], [0], [1], [0, 0, 1, 1], [], []>} : vector<8x32xf32>, vector<32x32xf32>, vector<8x32xf32> -> vector<8x32xf32>
    %cst_7 = arith.constant 0.000000e+00 : f32
    %6 = vector.broadcast %cst_7 : f32 to vector<3x32xf32>
    %c0_8 = arith.constant 0 : index
    %c0_9 = arith.constant 0 : index
    %7 = vector.load %arg16[%c0_8, %c0_9] : memref<11x32xf32, #tpu.memory_space<vmem>>, vector<3x32xf32>
    tpu.vector_store %arg16[%c0_8, %c0_9], %6 {strides = array<i32>} : memref<11x32xf32, #tpu.memory_space<vmem>>, vector<3x32xf32>,
    %c3 = arith.constant 3 : index
    %c0_10 = arith.constant 0 : index
    %8 = vector.load %arg16[%c3, %c0_10] : memref<11x32xf32, #tpu.memory_space<vmem>>, vector<8x32xf32>
    tpu.vector_store %arg16[%c3, %c0_10], %3 {strides = array<i32>} : memref<11x32xf32, #tpu.memory_space<vmem>>, vector<8x32xf32>,
    %c0_11 = arith.constant 0 : index
    %c0_12 = arith.constant 0 : index
    %9 = vector.load %arg4[%c0_11, %c0_12] : memref<4x32xf32, #tpu.memory_space<vmem>>, vector<4x32xf32>
    %cst_13 = arith.constant 0.000000e+00 : f32
    %10 = vector.broadcast %cst_13 : f32 to vector<8x32xf32>
    %11 = vector.extract_strided_slice %9 {offsets = [0, 0], sizes = [1, 32], strides = [1, 1]} : vector<4x32xf32> to vector<1x32xf32>
    %c0_14 = arith.constant 0 : index
    %c0_15 = arith.constant 0 : index
    %12 = vector.load %arg16[%c0_14, %c0_15] : memref<11x32xf32, #tpu.memory_space<vmem>>, vector<8x32xf32>
    %13 = vector.broadcast %11 : vector<1x32xf32> to vector<8x32xf32>
    %14 = arith.mulf %13, %12 : vector<8x32xf32>
    %15 = arith.addf %10, %14 : vector<8x32xf32>
    %16 = vector.extract_strided_slice %9 {offsets = [1, 0], sizes = [1, 32], strides = [1, 1]} : vector<4x32xf32> to vector<1x32xf32>
    %c1 = arith.constant 1 : index
    %c0_16 = arith.constant 0 : index
    %17 = vector.load %arg16[%c1, %c0_16] : memref<11x32xf32, #tpu.memory_space<vmem>>, vector<8x32xf32>
    %18 = vector.broadcast %16 : vector<1x32xf32> to vector<8x32xf32>
    %19 = arith.mulf %18, %17 : vector<8x32xf32>
    %20 = arith.addf %15, %19 : vector<8x32xf32>
    %21 = vector.extract_strided_slice %9 {offsets = [2, 0], sizes = [1, 32], strides = [1, 1]} : vector<4x32xf32> to vector<1x32xf32>
    %c2 = arith.constant 2 : index
    %c0_17 = arith.constant 0 : index
    %22 = vector.load %arg16[%c2, %c0_17] : memref<11x32xf32, #tpu.memory_space<vmem>>, vector<8x32xf32>
    %23 = vector.broadcast %21 : vector<1x32xf32> to vector<8x32xf32>
    %24 = arith.mulf %23, %22 : vector<8x32xf32>
    %25 = arith.addf %20, %24 : vector<8x32xf32>
    %26 = vector.extract_strided_slice %9 {offsets = [3, 0], sizes = [1, 32], strides = [1, 1]} : vector<4x32xf32> to vector<1x32xf32>
    %c3_18 = arith.constant 3 : index
    %c0_19 = arith.constant 0 : index
    %27 = vector.load %arg16[%c3_18, %c0_19] : memref<11x32xf32, #tpu.memory_space<vmem>>, vector<8x32xf32>
    %28 = vector.broadcast %26 : vector<1x32xf32> to vector<8x32xf32>
    %29 = arith.mulf %28, %27 : vector<8x32xf32>
    %30 = arith.addf %25, %29 : vector<8x32xf32>
    %c0_20 = arith.constant 0 : index
    %c0_21 = arith.constant 0 : index
    %31 = vector.load %arg5[%c0_20, %c0_21] : memref<1x32xf32, #tpu.memory_space<vmem>>, vector<1x32xf32>
    %32 = vector.broadcast %31 : vector<1x32xf32> to vector<8x32xf32>
    %33 = arith.addf %30, %32 : vector<8x32xf32>
    %cst_22 = arith.constant 0.000000e+00 : f32
    %34 = vector.broadcast %cst_22 : f32 to vector<8x32xf32>
    %35 = arith.subf %34, %33 : vector<8x32xf32>
    %36 = math.exp %35 : vector<8x32xf32>
    %cst_23 = arith.constant 1.000000e+00 : f32
    %37 = vector.broadcast %cst_23 : f32 to vector<8x32xf32>
    %38 = arith.addf %37, %36 : vector<8x32xf32>
    %39 = arith.divf %33, %38 : vector<8x32xf32>
    %c0_24 = arith.constant 0 : index
    %c0_25 = arith.constant 0 : index
    %40 = vector.load %arg6[%c0_24, %c0_25] : memref<32x16xf32, #tpu.memory_space<vmem>>, vector<32x16xf32>
    %cst_26 = arith.constant dense<0.000000e+00> : vector<8x16xf32>
    %41 = tpu.matmul %39, %40, %cst_26 {dimension_numbers = #tpu.dot_dimension_numbers<[1], [0], [0], [1], [0, 0, 1, 1], [], []>} : vector<8x32xf32>, vector<32x16xf32>, vector<8x16xf32> -> vector<8x16xf32>
    %c0_27 = arith.constant 0 : index
    %c0_28 = arith.constant 0 : index
    %42 = vector.load %arg7[%c0_27, %c0_28] : memref<32x16xf32, #tpu.memory_space<vmem>>, vector<32x16xf32>
    %cst_29 = arith.constant dense<0.000000e+00> : vector<8x16xf32>
    %43 = tpu.matmul %39, %42, %cst_29 {dimension_numbers = #tpu.dot_dimension_numbers<[1], [0], [0], [1], [0, 0, 1, 1], [], []>} : vector<8x32xf32>, vector<32x16xf32>, vector<8x16xf32> -> vector<8x16xf32>
    %c0_30 = arith.constant 0 : index
    %c0_31 = arith.constant 0 : index
    %44 = vector.load %arg8[%c0_30, %c0_31] : memref<32x2xf32, #tpu.memory_space<vmem>>, vector<32x2xf32>
    %cst_32 = arith.constant dense<0.000000e+00> : vector<8x2xf32>
    %45 = tpu.matmul %39, %44, %cst_32 {dimension_numbers = #tpu.dot_dimension_numbers<[1], [0], [0], [1], [0, 0, 1, 1], [], []>} : vector<8x32xf32>, vector<32x2xf32>, vector<8x2xf32> -> vector<8x2xf32>
    %c0_33 = arith.constant 0 : index
    %c0_34 = arith.constant 0 : index
    %46 = vector.load %arg9[%c0_33, %c0_34] : memref<2x32xf32, #tpu.memory_space<vmem>>, vector<2x32xf32>
    %cst_35 = arith.constant dense<0.000000e+00> : vector<8x32xf32>
    %47 = tpu.matmul %45, %46, %cst_35 {dimension_numbers = #tpu.dot_dimension_numbers<[1], [0], [0], [1], [0, 0, 1, 1], [], []>} : vector<8x2xf32>, vector<2x32xf32>, vector<8x32xf32> -> vector<8x32xf32>
    %c0_36 = arith.constant 0 : index
    %c0_37 = arith.constant 0 : index
    %48 = vector.load %arg10[%c0_36, %c0_37] : memref<1x32xf32, #tpu.memory_space<vmem>>, vector<1x32xf32>
    %49 = vector.broadcast %48 : vector<1x32xf32> to vector<8x32xf32>
    %50 = arith.addf %49, %47 : vector<8x32xf32>
    %cst_38 = arith.constant 0.000000e+00 : f32
    %51 = vector.broadcast %cst_38 : f32 to vector<8x32xf32>
    %52 = arith.maximumf %50, %51 : vector<8x32xf32>
    %53 = math.absf %50 : vector<8x32xf32>
    %cst_39 = arith.constant 0.000000e+00 : f32
    %54 = vector.broadcast %cst_39 : f32 to vector<8x32xf32>
    %55 = arith.subf %54, %53 : vector<8x32xf32>
    %56 = math.exp %55 : vector<8x32xf32>
    %cst_40 = arith.constant 1.000000e+00 : f32
    %57 = vector.broadcast %cst_40 : f32 to vector<8x32xf32>
    %58 = arith.addf %57, %56 : vector<8x32xf32>
    %59 = math.log %58 : vector<8x32xf32>
    %60 = arith.addf %52, %59 : vector<8x32xf32>
    %c0_41 = arith.constant 0 : index
    %c0_42 = arith.constant 0 : index
    %c0_43 = arith.constant 0 : index
    %61 = vector.load %arg11[%c0_41, %c0_42, %c0_43] : memref<1x8x32xf32, #tpu.memory_space<vmem>>, vector<1x8x32xf32>
    %62 = vector.shape_cast %61 : vector<1x8x32xf32> to vector<8x32xf32>
    %63 = vector.shape_cast %39 : vector<8x32xf32> to vector<1x8x32xf32>
    tpu.vector_store %arg11[%c0_41, %c0_42, %c0_43], %63 {strides = array<i32>} : memref<1x8x32xf32, #tpu.memory_space<vmem>>, vector<1x8x32xf32>,
    %cst_44 = arith.constant 0.000000e+00 : f32
    %64 = vector.broadcast %cst_44 : f32 to vector<8x32xf32>
    %65 = arith.subf %64, %5 : vector<8x32xf32>
    %66 = math.exp %65 : vector<8x32xf32>
    %cst_45 = arith.constant 1.000000e+00 : f32
    %67 = vector.broadcast %cst_45 : f32 to vector<8x32xf32>
    %68 = arith.addf %67, %66 : vector<8x32xf32>
    %69 = arith.divf %5, %68 : vector<8x32xf32>
    %c0_46 = arith.constant 0 : index
    %c0_47 = arith.constant 0 : index
    %c0_48 = arith.constant 0 : index
    %70 = vector.load %arg12[%c0_46, %c0_47, %c0_48] : memref<1x8x32xf32, #tpu.memory_space<vmem>>, vector<1x8x32xf32>
    %71 = vector.shape_cast %70 : vector<1x8x32xf32> to vector<8x32xf32>
    %72 = vector.shape_cast %69 : vector<8x32xf32> to vector<1x8x32xf32>
    tpu.vector_store %arg12[%c0_46, %c0_47, %c0_48], %72 {strides = array<i32>} : memref<1x8x32xf32, #tpu.memory_space<vmem>>, vector<1x8x32xf32>,
    %c0_49 = arith.constant 0 : index
    %c0_50 = arith.constant 0 : index
    %c0_51 = arith.constant 0 : index
    %73 = vector.load %arg13[%c0_49, %c0_50, %c0_51] : memref<1x8x32xf32, #tpu.memory_space<vmem>>, vector<1x8x32xf32>
    %74 = vector.shape_cast %73 : vector<1x8x32xf32> to vector<8x32xf32>
    %75 = vector.shape_cast %60 : vector<8x32xf32> to vector<1x8x32xf32>
    tpu.vector_store %arg13[%c0_49, %c0_50, %c0_51], %75 {strides = array<i32>} : memref<1x8x32xf32, #tpu.memory_space<vmem>>, vector<1x8x32xf32>,
    %c0_52 = arith.constant 0 : index
    %c0_53 = arith.constant 0 : index
    %c0_54 = arith.constant 0 : index
    %76 = vector.load %arg14[%c0_52, %c0_53, %c0_54] : memref<1x8x16xf32, #tpu.memory_space<vmem>>, vector<1x8x16xf32>
    %77 = vector.shape_cast %76 : vector<1x8x16xf32> to vector<8x16xf32>
    %78 = vector.shape_cast %41 : vector<8x16xf32> to vector<1x8x16xf32>
    tpu.vector_store %arg14[%c0_52, %c0_53, %c0_54], %78 {strides = array<i32>} : memref<1x8x16xf32, #tpu.memory_space<vmem>>, vector<1x8x16xf32>,
    %c0_55 = arith.constant 0 : index
    %c0_56 = arith.constant 0 : index
    %c0_57 = arith.constant 0 : index
    %79 = vector.load %arg15[%c0_55, %c0_56, %c0_57] : memref<1x8x16xf32, #tpu.memory_space<vmem>>, vector<1x8x16xf32>
    %80 = vector.shape_cast %79 : vector<1x8x16xf32> to vector<8x16xf32>
    %81 = vector.shape_cast %43 : vector<8x16xf32> to vector<1x8x16xf32>
    tpu.vector_store %arg15[%c0_55, %c0_56, %c0_57], %81 {strides = array<i32>} : memref<1x8x16xf32, #tpu.memory_space<vmem>>, vector<1x8x16xf32>,
    return
  }
  func.func @transform_0(%arg0: i32) -> (i32, i32, i32) {
    %c0_i32 = arith.constant 0 : i32
    %c0_i32_0 = arith.constant 0 : i32
    %c0_i32_1 = arith.constant 0 : i32
    return %arg0, %c0_i32, %c0_i32_0 : i32, i32, i32
  }
  func.func @transform_1(%arg0: i32) -> (i32, i32) {
    %c0_i32 = arith.constant 0 : i32
    %c0_i32_0 = arith.constant 0 : i32
    %c0_i32_1 = arith.constant 0 : i32
    return %c0_i32, %c0_i32_0 : i32, i32
  }
  func.func @transform_2(%arg0: i32) -> (i32, i32) {
    %c0_i32 = arith.constant 0 : i32
    %c0_i32_0 = arith.constant 0 : i32
    %c0_i32_1 = arith.constant 0 : i32
    return %c0_i32, %c0_i32_0 : i32, i32
  }
  func.func @transform_3(%arg0: i32) -> (i32, i32) {
    %c0_i32 = arith.constant 0 : i32
    %c0_i32_0 = arith.constant 0 : i32
    %c0_i32_1 = arith.constant 0 : i32
    return %c0_i32, %c0_i32_0 : i32, i32
  }
  func.func @transform_4(%arg0: i32) -> (i32, i32) {
    %c0_i32 = arith.constant 0 : i32
    %c0_i32_0 = arith.constant 0 : i32
    %c0_i32_1 = arith.constant 0 : i32
    return %c0_i32, %c0_i32_0 : i32, i32
  }
  func.func @transform_5(%arg0: i32) -> (i32, i32) {
    %c0_i32 = arith.constant 0 : i32
    %c0_i32_0 = arith.constant 0 : i32
    %c0_i32_1 = arith.constant 0 : i32
    return %c0_i32, %c0_i32_0 : i32, i32
  }
  func.func @transform_6(%arg0: i32) -> (i32, i32) {
    %c0_i32 = arith.constant 0 : i32
    %c0_i32_0 = arith.constant 0 : i32
    %c0_i32_1 = arith.constant 0 : i32
    return %c0_i32, %c0_i32_0 : i32, i32
  }
  func.func @transform_7(%arg0: i32) -> (i32, i32) {
    %c0_i32 = arith.constant 0 : i32
    %c0_i32_0 = arith.constant 0 : i32
    %c0_i32_1 = arith.constant 0 : i32
    return %c0_i32, %c0_i32_0 : i32, i32
  }
  func.func @transform_8(%arg0: i32) -> (i32, i32) {
    %c0_i32 = arith.constant 0 : i32
    %c0_i32_0 = arith.constant 0 : i32
    %c0_i32_1 = arith.constant 0 : i32
    return %c0_i32, %c0_i32_0 : i32, i32
  }
  func.func @transform_9(%arg0: i32) -> (i32, i32) {
    %c0_i32 = arith.constant 0 : i32
    %c0_i32_0 = arith.constant 0 : i32
    %c0_i32_1 = arith.constant 0 : i32
    return %c0_i32, %c0_i32_0 : i32, i32
  }
  func.func @transform_10(%arg0: i32) -> (i32, i32, i32) {
    %c0_i32 = arith.constant 0 : i32
    %c0_i32_0 = arith.constant 0 : i32
    %c0_i32_1 = arith.constant 0 : i32
    return %arg0, %c0_i32, %c0_i32_0 : i32, i32, i32
  }
  func.func @transform_11(%arg0: i32) -> (i32, i32, i32) {
    %c0_i32 = arith.constant 0 : i32
    %c0_i32_0 = arith.constant 0 : i32
    %c0_i32_1 = arith.constant 0 : i32
    return %arg0, %c0_i32, %c0_i32_0 : i32, i32, i32
  }
  func.func @transform_12(%arg0: i32) -> (i32, i32, i32) {
    %c0_i32 = arith.constant 0 : i32
    %c0_i32_0 = arith.constant 0 : i32
    %c0_i32_1 = arith.constant 0 : i32
    return %arg0, %c0_i32, %c0_i32_0 : i32, i32, i32
  }
  func.func @transform_13(%arg0: i32) -> (i32, i32, i32) {
    %c0_i32 = arith.constant 0 : i32
    %c0_i32_0 = arith.constant 0 : i32
    %c0_i32_1 = arith.constant 0 : i32
    return %arg0, %c0_i32, %c0_i32_0 : i32, i32, i32
  }
  func.func @transform_14(%arg0: i32) -> (i32, i32, i32) {
    %c0_i32 = arith.constant 0 : i32
    %c0_i32_0 = arith.constant 0 : i32
    %c0_i32_1 = arith.constant 0 : i32
    return %arg0, %c0_i32, %c0_i32_0 : i32, i32, i32
  }
}

module attributes {stable_mosaic.version = 11 : i64} {
  func.func @_mamba_scan_kernel(%arg0: i32, %arg1: memref<1x8x32xf32, #tpu.memory_space<vmem>>, %arg2: memref<1x8x32xf32, #tpu.memory_space<vmem>>, %arg3: memref<1x8x32xf32, #tpu.memory_space<vmem>>, %arg4: memref<1x8x16x1xf32, #tpu.memory_space<vmem>>, %arg5: memref<1x8x16xf32, #tpu.memory_space<vmem>>, %arg6: memref<16x32xf32, #tpu.memory_space<vmem>>, %arg7: memref<1x32xf32, #tpu.memory_space<vmem>>, %arg8: memref<32x32xf32, #tpu.memory_space<vmem>>, %arg9: memref<1x8x32xf32, #tpu.memory_space<vmem>>, %arg10: memref<16x32xf32, #tpu.memory_space<vmem>>, %arg11: memref<8x32xf32, #tpu.memory_space<vmem>>) attributes {dimension_semantics = [#tpu.dimension_semantics<parallel>], iteration_bounds = array<i64: 2>, scalar_prefetch = 0 : i64, scratch_operands = 2 : i64, tpu.core_type = #tpu.core_type<tc>, window_params = [{transform_indices = @transform_0, window_bounds = array<i64: 1, 8, 32>}, {transform_indices = @transform_1, window_bounds = array<i64: 1, 8, 32>}, {transform_indices = @transform_2, window_bounds = array<i64: 1, 8, 32>}, {transform_indices = @transform_3, window_bounds = array<i64: 1, 8, 16, 1>}, {transform_indices = @transform_4, window_bounds = array<i64: 1, 8, 16>}, {pipeline_mode = #tpu.pipeline_mode<synchronous>, transform_indices = @transform_5, window_bounds = array<i64: 16, 32>}, {pipeline_mode = #tpu.pipeline_mode<synchronous>, transform_indices = @transform_6, window_bounds = array<i64: 1, 32>}, {pipeline_mode = #tpu.pipeline_mode<synchronous>, transform_indices = @transform_7, window_bounds = array<i64: 32, 32>}, {transform_indices = @transform_8, window_bounds = array<i64: 1, 8, 32>}]} {
    %c0 = arith.constant 0 : index
    %c0_0 = arith.constant 0 : index
    %0 = vector.load %arg6[%c0, %c0_0] : memref<16x32xf32, #tpu.memory_space<vmem>>, vector<16x32xf32>
    %cst = arith.constant 0.000000e+00 : f32
    %1 = vector.broadcast %cst : f32 to vector<16x32xf32>
    %2 = arith.subf %1, %0 : vector<16x32xf32>
    %3 = math.exp %2 : vector<16x32xf32>
    %c0_1 = arith.constant 0 : index
    %c0_2 = arith.constant 0 : index
    %4 = vector.load %arg7[%c0_1, %c0_2] : memref<1x32xf32, #tpu.memory_space<vmem>>, vector<1x32xf32>
    %cst_3 = arith.constant 0.000000e+00 : f32
    %5 = vector.broadcast %cst_3 : f32 to vector<16x32xf32>
    %c0_4 = arith.constant 0 : index
    %c0_5 = arith.constant 0 : index
    %6 = vector.load %arg10[%c0_4, %c0_5] : memref<16x32xf32, #tpu.memory_space<vmem>>, vector<16x32xf32>
    tpu.vector_store %arg10[%c0_4, %c0_5], %5 {strides = array<i32>} : memref<16x32xf32, #tpu.memory_space<vmem>>, vector<16x32xf32>,
    %c0_i32 = arith.constant 0 : i32
    %c8_i32 = arith.constant 8 : i32
    %7 = arith.addi %c0_i32, %c8_i32 : i32
    %c1_i32 = arith.constant 1 : i32
    scf.for %arg12 = %c0_i32 to %7 step %c1_i32  : i32 {
      %c0_18 = arith.constant 0 : index
      %17 = arith.index_cast %arg12 : i32 to index
      %c0_19 = arith.constant 0 : index
      %18 = vector.load %arg3[%c0_18, %17, %c0_19] : memref<1x8x32xf32, #tpu.memory_space<vmem>>, vector<1x1x32xf32>
      %19 = vector.shape_cast %18 : vector<1x1x32xf32> to vector<1x32xf32>
      %c0_20 = arith.constant 0 : index
      %20 = arith.index_cast %arg12 : i32 to index
      %c0_21 = arith.constant 0 : index
      %21 = vector.load %arg1[%c0_20, %20, %c0_21] : memref<1x8x32xf32, #tpu.memory_space<vmem>>, vector<1x1x32xf32>
      %22 = vector.shape_cast %21 : vector<1x1x32xf32> to vector<1x32xf32>
      %c0_22 = arith.constant 0 : index
      %23 = arith.index_cast %arg12 : i32 to index
      %c0_23 = arith.constant 0 : index
      %24 = vector.load %arg5[%c0_22, %23, %c0_23] : memref<1x8x16xf32, #tpu.memory_space<vmem>>, vector<1x1x16xf32>
      %25 = vector.shape_cast %24 : vector<1x1x16xf32> to vector<1x16xf32>
      %c0_24 = arith.constant 0 : index
      %26 = arith.index_cast %arg12 : i32 to index
      %c0_25 = arith.constant 0 : index
      %c0_26 = arith.constant 0 : index
      %27 = vector.load %arg4[%c0_24, %26, %c0_25, %c0_26] : memref<1x8x16x1xf32, #tpu.memory_space<vmem>>, vector<1x1x16x1xf32>
      %28 = vector.shape_cast %27 : vector<1x1x16x1xf32> to vector<16x1xf32>
      %29 = vector.broadcast %19 : vector<1x32xf32> to vector<16x32xf32>
      %30 = arith.mulf %3, %29 : vector<16x32xf32>
      %31 = arith.mulf %19, %22 : vector<1x32xf32>
      %32 = vector.broadcast %28 : vector<16x1xf32> to vector<16x32xf32>
      %33 = vector.broadcast %31 : vector<1x32xf32> to vector<16x32xf32>
      %34 = arith.mulf %32, %33 : vector<16x32xf32>
      %c0_27 = arith.constant 0 : index
      %c0_28 = arith.constant 0 : index
      %35 = vector.load %arg10[%c0_27, %c0_28] : memref<16x32xf32, #tpu.memory_space<vmem>>, vector<16x32xf32>
      %36 = arith.mulf %30, %35 : vector<16x32xf32>
      %37 = arith.addf %36, %34 : vector<16x32xf32>
      %c0_29 = arith.constant 0 : index
      %c0_30 = arith.constant 0 : index
      %38 = vector.load %arg10[%c0_29, %c0_30] : memref<16x32xf32, #tpu.memory_space<vmem>>, vector<16x32xf32>
      tpu.vector_store %arg10[%c0_29, %c0_30], %37 {strides = array<i32>} : memref<16x32xf32, #tpu.memory_space<vmem>>, vector<16x32xf32>,
      %cst_31 = arith.constant dense<0.000000e+00> : vector<1x32xf32>
      %39 = tpu.matmul %25, %37, %cst_31 {dimension_numbers = #tpu.dot_dimension_numbers<[1], [0], [0], [1], [0, 0, 1, 1], [], []>} : vector<1x16xf32>, vector<16x32xf32>, vector<1x32xf32> -> vector<1x32xf32>
      %40 = arith.mulf %4, %22 : vector<1x32xf32>
      %41 = arith.addf %39, %40 : vector<1x32xf32>
      %42 = arith.index_cast %arg12 : i32 to index
      %c0_32 = arith.constant 0 : index
      %43 = vector.load %arg11[%42, %c0_32] : memref<8x32xf32, #tpu.memory_space<vmem>>, vector<1x32xf32>
      tpu.vector_store %arg11[%42, %c0_32], %41 {strides = array<i32>} : memref<8x32xf32, #tpu.memory_space<vmem>>, vector<1x32xf32>,
    }
    %c8_i32_6 = arith.constant 8 : i32
    %c0_7 = arith.constant 0 : index
    %c0_8 = arith.constant 0 : index
    %8 = vector.load %arg11[%c0_7, %c0_8] : memref<8x32xf32, #tpu.memory_space<vmem>>, vector<8x32xf32>
    %c0_9 = arith.constant 0 : index
    %c0_10 = arith.constant 0 : index
    %c0_11 = arith.constant 0 : index
    %9 = vector.load %arg2[%c0_9, %c0_10, %c0_11] : memref<1x8x32xf32, #tpu.memory_space<vmem>>, vector<1x8x32xf32>
    %10 = vector.shape_cast %9 : vector<1x8x32xf32> to vector<8x32xf32>
    %11 = arith.mulf %8, %10 : vector<8x32xf32>
    %c0_12 = arith.constant 0 : index
    %c0_13 = arith.constant 0 : index
    %12 = vector.load %arg8[%c0_12, %c0_13] : memref<32x32xf32, #tpu.memory_space<vmem>>, vector<32x32xf32>
    %cst_14 = arith.constant dense<0.000000e+00> : vector<8x32xf32>
    %13 = tpu.matmul %11, %12, %cst_14 {dimension_numbers = #tpu.dot_dimension_numbers<[1], [0], [0], [1], [0, 0, 1, 1], [], []>} : vector<8x32xf32>, vector<32x32xf32>, vector<8x32xf32> -> vector<8x32xf32>
    %c0_15 = arith.constant 0 : index
    %c0_16 = arith.constant 0 : index
    %c0_17 = arith.constant 0 : index
    %14 = vector.load %arg9[%c0_15, %c0_16, %c0_17] : memref<1x8x32xf32, #tpu.memory_space<vmem>>, vector<1x8x32xf32>
    %15 = vector.shape_cast %14 : vector<1x8x32xf32> to vector<8x32xf32>
    %16 = vector.shape_cast %13 : vector<8x32xf32> to vector<1x8x32xf32>
    tpu.vector_store %arg9[%c0_15, %c0_16, %c0_17], %16 {strides = array<i32>} : memref<1x8x32xf32, #tpu.memory_space<vmem>>, vector<1x8x32xf32>,
    return
  }
  func.func @transform_0(%arg0: i32) -> (i32, i32, i32) {
    %c0_i32 = arith.constant 0 : i32
    %c0_i32_0 = arith.constant 0 : i32
    %c0_i32_1 = arith.constant 0 : i32
    return %arg0, %c0_i32, %c0_i32_0 : i32, i32, i32
  }
  func.func @transform_1(%arg0: i32) -> (i32, i32, i32) {
    %c0_i32 = arith.constant 0 : i32
    %c0_i32_0 = arith.constant 0 : i32
    %c0_i32_1 = arith.constant 0 : i32
    return %arg0, %c0_i32, %c0_i32_0 : i32, i32, i32
  }
  func.func @transform_2(%arg0: i32) -> (i32, i32, i32) {
    %c0_i32 = arith.constant 0 : i32
    %c0_i32_0 = arith.constant 0 : i32
    %c0_i32_1 = arith.constant 0 : i32
    return %arg0, %c0_i32, %c0_i32_0 : i32, i32, i32
  }
  func.func @transform_3(%arg0: i32) -> (i32, i32, i32, i32) {
    %c0_i32 = arith.constant 0 : i32
    %c0_i32_0 = arith.constant 0 : i32
    %c0_i32_1 = arith.constant 0 : i32
    %c0_i32_2 = arith.constant 0 : i32
    return %arg0, %c0_i32, %c0_i32_0, %c0_i32_1 : i32, i32, i32, i32
  }
  func.func @transform_4(%arg0: i32) -> (i32, i32, i32) {
    %c0_i32 = arith.constant 0 : i32
    %c0_i32_0 = arith.constant 0 : i32
    %c0_i32_1 = arith.constant 0 : i32
    return %arg0, %c0_i32, %c0_i32_0 : i32, i32, i32
  }
  func.func @transform_5(%arg0: i32) -> (i32, i32) {
    %c0_i32 = arith.constant 0 : i32
    %c0_i32_0 = arith.constant 0 : i32
    %c0_i32_1 = arith.constant 0 : i32
    return %c0_i32, %c0_i32_0 : i32, i32
  }
  func.func @transform_6(%arg0: i32) -> (i32, i32) {
    %c0_i32 = arith.constant 0 : i32
    %c0_i32_0 = arith.constant 0 : i32
    %c0_i32_1 = arith.constant 0 : i32
    return %c0_i32, %c0_i32_0 : i32, i32
  }
  func.func @transform_7(%arg0: i32) -> (i32, i32) {
    %c0_i32 = arith.constant 0 : i32
    %c0_i32_0 = arith.constant 0 : i32
    %c0_i32_1 = arith.constant 0 : i32
    return %c0_i32, %c0_i32_0 : i32, i32
  }
  func.func @transform_8(%arg0: i32) -> (i32, i32, i32) {
    %c0_i32 = arith.constant 0 : i32
    %c0_i32_0 = arith.constant 0 : i32
    %c0_i32_1 = arith.constant 0 : i32
    return %arg0, %c0_i32, %c0_i32_0 : i32, i32, i32
  }
}

</mosaic_0001>

<llo_original>
// kernel: mamba_block_forward.2
$region0: #{mamba_block_forward.2}
  #allocation0 [shape = 'u32[]', space=smem, size = 0x4, offset = 0x4, fixed_abs, tag = 'smem constant byte address 0x4 - core index']
  #allocation1 [shape = 'u32[144,128]{1,0:T(1,128)}', space=vmem, size = 0x12000, scoped, tag = 'internal scratch']
  #allocation2 [shape = 'f32[11,32]{1,0:T(8,128)}', space=vmem, size = 0x2000, scoped, tag = 'scratch operand']
  %s0 = inlined_call_operand.vmem [shape: f32[2,8,32], index: 0, kind: input, shape index: {}]
  %s1 = inlined_call_operand.vmem [shape: f32[32,32], index: 1, kind: input, shape index: {}]
  %s2 = inlined_call_operand.vmem [shape: f32[32,32], index: 2, kind: input, shape index: {}]
  %s3 = inlined_call_operand.vmem [shape: f32[4,32], index: 3, kind: input, shape index: {}]
  %s4 = inlined_call_operand.vmem [shape: f32[1,32], index: 4, kind: input, shape index: {}]
  %s5 = inlined_call_operand.vmem [shape: f32[32,16], index: 5, kind: input, shape index: {}]
  %s6 = inlined_call_operand.vmem [shape: f32[32,16], index: 6, kind: input, shape index: {}]
  %s7 = inlined_call_operand.vmem [shape: f32[32,2], index: 7, kind: input, shape index: {}]
  %s8 = inlined_call_operand.vmem [shape: f32[2,32], index: 8, kind: input, shape index: {}]
  %s9 = inlined_call_operand.vmem [shape: f32[1,32], index: 9, kind: input, shape index: {}]
  %s10 = inlined_call_operand.vmem [shape: f32[2,8,32], index: 10, kind: output, shape index: {0}]
  %s11 = inlined_call_operand.vmem [shape: f32[2,8,32], index: 11, kind: output, shape index: {1}]
  %s12 = inlined_call_operand.vmem [shape: f32[2,8,32], index: 12, kind: output, shape index: {2}]
  %s13 = inlined_call_operand.vmem [shape: f32[2,8,16], index: 13, kind: output, shape index: {3}]
  %s14 = inlined_call_operand.vmem [shape: f32[2,8,16], index: 14, kind: output, shape index: {4}]
  %15 = xla_tuple %s10, %s11, %s12, %s13, %s14
  %s16 = sld [smem:[#allocation0]]
  $region105: #{mamba_block_forward.2} parent=0
    _
  %s18 = ssub.s32 1, %s16
  %s19 = scalar_select 0, %s18, %s16
  loop: start=0, step=1, limit=4
  $region2: #{mamba_block_forward.2} parent=0 // loop_pre_header
    _
  $region3: #{mamba_block_forward.2} parent=0 // loop_header
    %s21 = sphi 0, %s25
    %p22 = scmp.ge.s32.totalorder %s21, 4
    %s31 = sphi 0, %s33
    %s34 = sphi 0, %s31
    %s35 = sphi 0, %s34
    %s51 = sphi 0, %s35
    %s55 = sphi 0, %s55
    %s57 = sphi 0, %s55
    %s58 = sphi 0, %s57
    %s72 = sphi 0, %s58
    %s76 = sphi 0, %s76
    %s78 = sphi 0, %s76
    %s79 = sphi 0, %s78
    %s93 = sphi 0, %s79
    %s97 = sphi 0, %s97
    %s99 = sphi 0, %s97
    %s100 = sphi 0, %s99
    %s114 = sphi 0, %s100
    %s118 = sphi 0, %s118
    %s120 = sphi 0, %s118
    %s121 = sphi 0, %s120
    %s135 = sphi 0, %s121
    %s139 = sphi 0, %s139
    %s141 = sphi 0, %s139
    %s142 = sphi 0, %s141
    %s156 = sphi 0, %s142
    %s160 = sphi 0, %s160
    %s162 = sphi 0, %s160
    %s163 = sphi 0, %s162
    %s177 = sphi 0, %s163
    %s181 = sphi 0, %s181
    %s183 = sphi 0, %s181
    %s184 = sphi 0, %s183
    %s198 = sphi 0, %s184
    %s202 = sphi 0, %s202
    %s204 = sphi 0, %s202
    %s205 = sphi 0, %s204
    %s219 = sphi 0, %s205
    %s223 = sphi 0, %s223
    %s225 = sphi 0, %s223
    %s226 = sphi 0, %s225
    %s240 = sphi 0, %s226
    %s246 = sphi 0, %s248
    %s249 = sphi 0, %s246
    %s250 = sphi 0, %s249
    %s266 = sphi 0, %s250
    %s272 = sphi 0, %s274
    %s275 = sphi 0, %s272
    %s276 = sphi 0, %s275
    %s292 = sphi 0, %s276
    %s298 = sphi 0, %s300
    %s301 = sphi 0, %s298
    %s302 = sphi 0, %s301
    %s318 = sphi 0, %s302
    %s324 = sphi 0, %s326
    %s327 = sphi 0, %s324
    %s328 = sphi 0, %s327
    %s344 = sphi 0, %s328
    %s350 = sphi 0, %s352
    %s353 = sphi 0, %s350
    %s354 = sphi 0, %s353
    %s370 = sphi 0, %s354
  $region4: #{mamba_block_forward.2} parent=0 // loop_header_branch
    %24 = sbr.rel (%p22) target = $region8
  $region5: #{mamba_block_forward.2} parent=0 // loop_body
    %s26 = ssub.s32 %s21, 1
    %s27 = ssub.s32 %s21, 2
    %s28 = sadd.s32 %s21, 1
    %s29 = ssub.s32 %s21, %s28
    %p30 = scmp.eq.s32.totalorder %s29, 0
    %s32 = sadd.s32 %s31, 1
    %s33 = scalar_select %p30, %s31, %s32
    %p36 = pneg %p30
    %p37 = scmp.eq.s32.totalorder %s21, 1
    %p38 = por %p36, %p37
    %p39 = scmp.ne.s32.totalorder %s31, %s34
    %p40 = scmp.eq.s32.totalorder %s21, 0
    %p41 = por %p39, %p40
    %p42 = scmp.ne.s32.totalorder %s31, %s34
    %p43 = scmp.eq.s32.totalorder %s26, 1
    %p44 = por %p42, %p43
    %p45 = scmp.ne.s32.totalorder %s34, %s35
    %p46 = scmp.eq.s32.totalorder %s26, 0
    %p47 = por %p45, %p46
    %p48 = scmp.ne.s32.totalorder %s34, %s35
    %p49 = scmp.eq.s32.totalorder %s27, 1
    %p50 = por %p48, %p49
    %p52 = scmp.ne.s32.totalorder %s35, %s51
    %p53 = scmp.eq.s32.totalorder %s27, 0
    %p54 = por %p52, %p53
    %s56 = sadd.s32 %s55, 1
    %p59 = scmp.eq.s32.totalorder %s21, 1
    %p60 = scmp.ne.s32.totalorder %s55, %s57
    %p61 = scmp.eq.s32.totalorder %s21, 0
    %p62 = por %p60, %p61
    %p63 = scmp.ne.s32.totalorder %s55, %s57
    %p64 = scmp.eq.s32.totalorder %s26, 1
    %p65 = por %p63, %p64
    %p66 = scmp.ne.s32.totalorder %s57, %s58
    %p67 = scmp.eq.s32.totalorder %s26, 0
    %p68 = por %p66, %p67
    %p69 = scmp.ne.s32.totalorder %s57, %s58
    %p70 = scmp.eq.s32.totalorder %s27, 1
    %p71 = por %p69, %p70
    %p73 = scmp.ne.s32.totalorder %s58, %s72
    %p74 = scmp.eq.s32.totalorder %s27, 0
    %p75 = por %p73, %p74
    %s77 = sadd.s32 %s76, 1
    %p80 = scmp.eq.s32.totalorder %s21, 1
    %p81 = scmp.ne.s32.totalorder %s76, %s78
    %p82 = scmp.eq.s32.totalorder %s21, 0
    %p83 = por %p81, %p82
    %p84 = scmp.ne.s32.totalorder %s76, %s78
    %p85 = scmp.eq.s32.totalorder %s26, 1
    %p86 = por %p84, %p85
    %p87 = scmp.ne.s32.totalorder %s78, %s79
    %p88 = scmp.eq.s32.totalorder %s26, 0
    %p89 = por %p87, %p88
    %p90 = scmp.ne.s32.totalorder %s78, %s79
    %p91 = scmp.eq.s32.totalorder %s27, 1
    %p92 = por %p90, %p91
    %p94 = scmp.ne.s32.totalorder %s79, %s93
    %p95 = scmp.eq.s32.totalorder %s27, 0
    %p96 = por %p94, %p95
    %s98 = sadd.s32 %s97, 1
    %p101 = scmp.eq.s32.totalorder %s21, 1
    %p102 = scmp.ne.s32.totalorder %s97, %s99
    %p103 = scmp.eq.s32.totalorder %s21, 0
    %p104 = por %p102, %p103
    %p105 = scmp.ne.s32.totalorder %s97, %s99
    %p106 = scmp.eq.s32.totalorder %s26, 1
    %p107 = por %p105, %p106
    %p108 = scmp.ne.s32.totalorder %s99, %s100
    %p109 = scmp.eq.s32.totalorder %s26, 0
    %p110 = por %p108, %p109
    %p111 = scmp.ne.s32.totalorder %s99, %s100
    %p112 = scmp.eq.s32.totalorder %s27, 1
    %p113 = por %p111, %p112
    %p115 = scmp.ne.s32.totalorder %s100, %s114
    %p116 = scmp.eq.s32.totalorder %s27, 0
    %p117 = por %p115, %p116
    %s119 = sadd.s32 %s118, 1
    %p122 = scmp.eq.s32.totalorder %s21, 1
    %p123 = scmp.ne.s32.totalorder %s118, %s120
    %p124 = scmp.eq.s32.totalorder %s21, 0
    %p125 = por %p123, %p124
    %p126 = scmp.ne.s32.totalorder %s118, %s120
    %p127 = scmp.eq.s32.totalorder %s26, 1
    %p128 = por %p126, %p127
    %p129 = scmp.ne.s32.totalorder %s120, %s121
    %p130 = scmp.eq.s32.totalorder %s26, 0
    %p131 = por %p129, %p130
    %p132 = scmp.ne.s32.totalorder %s120, %s121
    %p133 = scmp.eq.s32.totalorder %s27, 1
    %p134 = por %p132, %p133
    %p136 = scmp.ne.s32.totalorder %s121, %s135
    %p137 = scmp.eq.s32.totalorder %s27, 0
    %p138 = por %p136, %p137
    %s140 = sadd.s32 %s139, 1
    %p143 = scmp.eq.s32.totalorder %s21, 1
    %p144 = scmp.ne.s32.totalorder %s139, %s141
    %p145 = scmp.eq.s32.totalorder %s21, 0
    %p146 = por %p144, %p145
    %p147 = scmp.ne.s32.totalorder %s139, %s141
    %p148 = scmp.eq.s32.totalorder %s26, 1
    %p149 = por %p147, %p148
    %p150 = scmp.ne.s32.totalorder %s141, %s142
    %p151 = scmp.eq.s32.totalorder %s26, 0
    %p152 = por %p150, %p151
    %p153 = scmp.ne.s32.totalorder %s141, %s142
    %p154 = scmp.eq.s32.totalorder %s27, 1
    %p155 = por %p153, %p154
    %p157 = scmp.ne.s32.totalorder %s142, %s156
    %p158 = scmp.eq.s32.totalorder %s27, 0
    %p159 = por %p157, %p158
    %s161 = sadd.s32 %s160, 1
    %p164 = scmp.eq.s32.totalorder %s21, 1
    %p165 = scmp.ne.s32.totalorder %s160, %s162
    %p166 = scmp.eq.s32.totalorder %s21, 0
    %p167 = por %p165, %p166
    %p168 = scmp.ne.s32.totalorder %s160, %s162
    %p169 = scmp.eq.s32.totalorder %s26, 1
    %p170 = por %p168, %p169
    %p171 = scmp.ne.s32.totalorder %s162, %s163
    %p172 = scmp.eq.s32.totalorder %s26, 0
    %p173 = por %p171, %p172
    %p174 = scmp.ne.s32.totalorder %s162, %s163
    %p175 = scmp.eq.s32.totalorder %s27, 1
    %p176 = por %p174, %p175
    %p178 = scmp.ne.s32.totalorder %s163, %s177
    %p179 = scmp.eq.s32.totalorder %s27, 0
    %p180 = por %p178, %p179
    %s182 = sadd.s32 %s181, 1
    %p185 = scmp.eq.s32.totalorder %s21, 1
    %p186 = scmp.ne.s32.totalorder %s181, %s183
    %p187 = scmp.eq.s32.totalorder %s21, 0
    %p188 = por %p186, %p187
    %p189 = scmp.ne.s32.totalorder %s181, %s183
    %p190 = scmp.eq.s32.totalorder %s26, 1
    %p191 = por %p189, %p190
    %p192 = scmp.ne.s32.totalorder %s183, %s184
    %p193 = scmp.eq.s32.totalorder %s26, 0
    %p194 = por %p192, %p193
    %p195 = scmp.ne.s32.totalorder %s183, %s184
    %p196 = scmp.eq.s32.totalorder %s27, 1
    %p197 = por %p195, %p196
    %p199 = scmp.ne.s32.totalorder %s184, %s198
    %p200 = scmp.eq.s32.totalorder %s27, 0
    %p201 = por %p199, %p200
    %s203 = sadd.s32 %s202, 1
    %p206 = scmp.eq.s32.totalorder %s21, 1
    %p207 = scmp.ne.s32.totalorder %s202, %s204
    %p208 = scmp.eq.s32.totalorder %s21, 0
    %p209 = por %p207, %p208
    %p210 = scmp.ne.s32.totalorder %s202, %s204
    %p211 = scmp.eq.s32.totalorder %s26, 1
    %p212 = por %p210, %p211
    %p213 = scmp.ne.s32.totalorder %s204, %s205
    %p214 = scmp.eq.s32.totalorder %s26, 0
    %p215 = por %p213, %p214
    %p216 = scmp.ne.s32.totalorder %s204, %s205
    %p217 = scmp.eq.s32.totalorder %s27, 1
    %p218 = por %p216, %p217
    %p220 = scmp.ne.s32.totalorder %s205, %s219
    %p221 = scmp.eq.s32.totalorder %s27, 0
    %p222 = por %p220, %p221
    %s224 = sadd.s32 %s223, 1
    %p227 = scmp.eq.s32.totalorder %s21, 1
    %p228 = scmp.ne.s32.totalorder %s223, %s225
    %p229 = scmp.eq.s32.totalorder %s21, 0
    %p230 = por %p228, %p229
    %p231 = scmp.ne.s32.totalorder %s223, %s225
    %p232 = scmp.eq.s32.totalorder %s26, 1
    %p233 = por %p231, %p232
    %p234 = scmp.ne.s32.totalorder %s225, %s226
    %p235 = scmp.eq.s32.totalorder %s26, 0
    %p236 = por %p234, %p235
    %p237 = scmp.ne.s32.totalorder %s225, %s226
    %p238 = scmp.eq.s32.totalorder %s27, 1
    %p239 = por %p237, %p238
    %p241 = scmp.ne.s32.totalorder %s226, %s240
    %p242 = scmp.eq.s32.totalorder %s27, 0
    %p243 = por %p241, %p242
    %s244 = ssub.s32 %s21, %s28
    %p245 = scmp.eq.s32.totalorder %s244, 0
    %s247 = sadd.s32 %s246, 1
    %s248 = scalar_select %p245, %s246, %s247
    %p251 = pneg %p245
    %p252 = scmp.eq.s32.totalorder %s21, 1
    %p253 = por %p251, %p252
    %p254 = scmp.ne.s32.totalorder %s246, %s249
    %p255 = scmp.eq.s32.totalorder %s21, 0
    %p256 = por %p254, %p255
    %p257 = scmp.ne.s32.totalorder %s246, %s249
    %p258 = scmp.eq.s32.totalorder %s26, 1
    %p259 = por %p257, %p258
    %p260 = scmp.ne.s32.totalorder %s249, %s250
    %p261 = scmp.eq.s32.totalorder %s26, 0
    %p262 = por %p260, %p261
    %p263 = scmp.ne.s32.totalorder %s249, %s250
    %p264 = scmp.eq.s32.totalorder %s27, 1
    %p265 = por %p263, %p264
    %p267 = scmp.ne.s32.totalorder %s250, %s266
    %p268 = scmp.eq.s32.totalorder %s27, 0
    %p269 = por %p267, %p268
    %s270 = ssub.s32 %s21, %s28
    %p271 = scmp.eq.s32.totalorder %s270, 0
    %s273 = sadd.s32 %s272, 1
    %s274 = scalar_select %p271, %s272, %s273
    %p277 = pneg %p271
    %p278 = scmp.eq.s32.totalorder %s21, 1
    %p279 = por %p277, %p278
    %p280 = scmp.ne.s32.totalorder %s272, %s275
    %p281 = scmp.eq.s32.totalorder %s21, 0
    %p282 = por %p280, %p281
    %p283 = scmp.ne.s32.totalorder %s272, %s275
    %p284 = scmp.eq.s32.totalorder %s26, 1
    %p285 = por %p283, %p284
    %p286 = scmp.ne.s32.totalorder %s275, %s276
    %p287 = scmp.eq.s32.totalorder %s26, 0
    %p288 = por %p286, %p287
    %p289 = scmp.ne.s32.totalorder %s275, %s276
    %p290 = scmp.eq.s32.totalorder %s27, 1
    %p291 = por %p289, %p290
    %p293 = scmp.ne.s32.totalorder %s276, %s292
    %p294 = scmp.eq.s32.totalorder %s27, 0
    %p295 = por %p293, %p294
    %s296 = ssub.s32 %s21, %s28
    %p297 = scmp.eq.s32.totalorder %s296, 0
    %s299 = sadd.s32 %s298, 1
    %s300 = scalar_select %p297, %s298, %s299
    %p303 = pneg %p297
    %p304 = scmp.eq.s32.totalorder %s21, 1
    %p305 = por %p303, %p304
    %p306 = scmp.ne.s32.totalorder %s298, %s301
    %p307 = scmp.eq.s32.totalorder %s21, 0
    %p308 = por %p306, %p307
    %p309 = scmp.ne.s32.totalorder %s298, %s301
    %p310 = scmp.eq.s32.totalorder %s26, 1
    %p311 = por %p309, %p310
    %p312 = scmp.ne.s32.totalorder %s301, %s302
    %p313 = scmp.eq.s32.totalorder %s26, 0
    %p314 = por %p312, %p313
    %p315 = scmp.ne.s32.totalorder %s301, %s302
    %p316 = scmp.eq.s32.totalorder %s27, 1
    %p317 = por %p315, %p316
    %p319 = scmp.ne.s32.totalorder %s302, %s318
    %p320 = scmp.eq.s32.totalorder %s27, 0
    %p321 = por %p319, %p320
    %s322 = ssub.s32 %s21, %s28
    %p323 = scmp.eq.s32.totalorder %s322, 0
    %s325 = sadd.s32 %s324, 1
    %s326 = scalar_select %p323, %s324, %s325
    %p329 = pneg %p323
    %p330 = scmp.eq.s32.totalorder %s21, 1
    %p331 = por %p329, %p330
    %p332 = scmp.ne.s32.totalorder %s324, %s327
    %p333 = scmp.eq.s32.totalorder %s21, 0
    %p334 = por %p332, %p333
    %p335 = scmp.ne.s32.totalorder %s324, %s327
    %p336 = scmp.eq.s32.totalorder %s26, 1
    %p337 = por %p335, %p336
    %p338 = scmp.ne.s32.totalorder %s327, %s328
    %p339 = scmp.eq.s32.totalorder %s26, 0
    %p340 = por %p338, %p339
    %p341 = scmp.ne.s32.totalorder %s327, %s328
    %p342 = scmp.eq.s32.totalorder %s27, 1
    %p343 = por %p341, %p342
    %p345 = scmp.ne.s32.totalorder %s328, %s344
    %p346 = scmp.eq.s32.totalorder %s27, 0
    %p347 = por %p345, %p346
    %s348 = ssub.s32 %s21, %s28
    %p349 = scmp.eq.s32.totalorder %s348, 0
    %s351 = sadd.s32 %s350, 1
    %s352 = scalar_select %p349, %s350, %s351
    %p355 = pneg %p349
    %p356 = scmp.eq.s32.totalorder %s21, 1
    %p357 = por %p355, %p356
    %p358 = scmp.ne.s32.totalorder %s350, %s353
    %p359 = scmp.eq.s32.totalorder %s21, 0
    %p360 = por %p358, %p359
    %p361 = scmp.ne.s32.totalorder %s350, %s353
    %p362 = scmp.eq.s32.totalorder %s26, 1
    %p363 = por %p361, %p362
    %p364 = scmp.ne.s32.totalorder %s353, %s354
    %p365 = scmp.eq.s32.totalorder %s26, 0
    %p366 = por %p364, %p365
    %p367 = scmp.ne.s32.totalorder %s353, %s354
    %p368 = scmp.eq.s32.totalorder %s27, 1
    %p369 = por %p367, %p368
    %p371 = scmp.ne.s32.totalorder %s354, %s370
    %p372 = scmp.eq.s32.totalorder %s27, 0
    %p373 = por %p371, %p372
    %p374 = scmp.le.s32.totalorder 1, %s21
    %p375 = scmp.lt.s32.totalorder %s21, 3
    %p376 = pnand %p374, %p375
    %p377 = pneg %p376
    // Predicated region
    $region9: #{mamba_block_forward.2} parent=5 // pred_check
      _
    $region10: #{mamba_block_forward.2} parent=5 // pred_check_branch
      %379 = sbr.rel (%p376) target = $region12
    $region11: #{mamba_block_forward.2} parent=5 // pred_region
      %s380 = ssub.s32 %s21, 1
      // Predicated region
      $region13: #{mamba_block_forward.2} parent=11 // pred_check
        %p381 = pneg %p68
      $region14: #{mamba_block_forward.2} parent=11 // pred_check_branch
        %383 = sbr.rel (%p381) target = $region16
      $region15: #{mamba_block_forward.2} parent=11 // pred_region
        _
      $region16: #{mamba_block_forward.2} parent=11 // pred_fallthru
        _
      // Predicated region
      $region17: #{mamba_block_forward.2} parent=11 // pred_check
        %p384 = pneg %p89
      $region18: #{mamba_block_forward.2} parent=11 // pred_check_branch
        %386 = sbr.rel (%p384) target = $region20
      $region19: #{mamba_block_forward.2} parent=11 // pred_region
        _
      $region20: #{mamba_block_forward.2} parent=11 // pred_fallthru
        _
      // Predicated region
      $region21: #{mamba_block_forward.2} parent=11 // pred_check
        %p387 = pneg %p110
      $region22: #{mamba_block_forward.2} parent=11 // pred_check_branch
        %389 = sbr.rel (%p387) target = $region24
      $region23: #{mamba_block_forward.2} parent=11 // pred_region
        _
      $region24: #{mamba_block_forward.2} parent=11 // pred_fallthru
        _
      // Predicated region
      $region25: #{mamba_block_forward.2} parent=11 // pred_check
        %p390 = pneg %p131
      $region26: #{mamba_block_forward.2} parent=11 // pred_check_branch
        %392 = sbr.rel (%p390) target = $region28
      $region27: #{mamba_block_forward.2} parent=11 // pred_region
        _
      $region28: #{mamba_block_forward.2} parent=11 // pred_fallthru
        _
      // Predicated region
      $region29: #{mamba_block_forward.2} parent=11 // pred_check
        %p393 = pneg %p152
      $region30: #{mamba_block_forward.2} parent=11 // pred_check_branch
        %395 = sbr.rel (%p393) target = $region32
      $region31: #{mamba_block_forward.2} parent=11 // pred_region
        _
      $region32: #{mamba_block_forward.2} parent=11 // pred_fallthru
        _
      // Predicated region
      $region33: #{mamba_block_forward.2} parent=11 // pred_check
        %p396 = pneg %p173
      $region34: #{mamba_block_forward.2} parent=11 // pred_check_branch
        %398 = sbr.rel (%p396) target = $region36
      $region35: #{mamba_block_forward.2} parent=11 // pred_region
        _
      $region36: #{mamba_block_forward.2} parent=11 // pred_fallthru
        _
      // Predicated region
      $region37: #{mamba_block_forward.2} parent=11 // pred_check
        %p399 = pneg %p194
      $region38: #{mamba_block_forward.2} parent=11 // pred_check_branch
        %401 = sbr.rel (%p399) target = $region40
      $region39: #{mamba_block_forward.2} parent=11 // pred_region
        _
      $region40: #{mamba_block_forward.2} parent=11 // pred_fallthru
        _
      // Predicated region
      $region41: #{mamba_block_forward.2} parent=11 // pred_check
        %p402 = pneg %p215
      $region42: #{mamba_block_forward.2} parent=11 // pred_check_branch
        %404 = sbr.rel (%p402) target = $region44
      $region43: #{mamba_block_forward.2} parent=11 // pred_region
        _
      $region44: #{mamba_block_forward.2} parent=11 // pred_fallthru
        _
      // Predicated region
      $region45: #{mamba_block_forward.2} parent=11 // pred_check
        %p405 = pneg %p236
      $region46: #{mamba_block_forward.2} parent=11 // pred_check_branch
        %407 = sbr.rel (%p405) target = $region48
      $region47: #{mamba_block_forward.2} parent=11 // pred_region
        _
      $region48: #{mamba_block_forward.2} parent=11 // pred_fallthru
        _
    $region12: #{mamba_block_forward.2} parent=5 // pred_fallthru
      _
    %p408 = scmp.lt.s32.totalorder %s21, 2
    // Predicated region
    $region49: #{mamba_block_forward.2} parent=5 // pred_check
      %p409 = pneg %p408
    $region50: #{mamba_block_forward.2} parent=5 // pred_check_branch
      %411 = sbr.rel (%p409) target = $region52
    $region51: #{mamba_block_forward.2} parent=5 // pred_region
      // Predicated region
      $region53: #{mamba_block_forward.2} parent=51 // pred_check
        %p412 = pneg %p41
      $region54: #{mamba_block_forward.2} parent=51 // pred_check_branch
        %414 = sbr.rel (%p412) target = $region56
      $region55: #{mamba_block_forward.2} parent=51 // pred_region
        %p415 = scmp.lt.s32.totalorder %s21, 1
        %s416 = scalar_select %p415, %s21, 1
        %s417 = smul.addr %s416, 8
        %s418 = scalar_lea.vmem %s0, %s417
      $region56: #{mamba_block_forward.2} parent=51 // pred_fallthru
        _
    $region52: #{mamba_block_forward.2} parent=5 // pred_fallthru
      _
    %p419 = scmp.le.s32.totalorder 1, %s21
    %p420 = scmp.lt.s32.totalorder %s21, 3
    %p421 = pnand %p419, %p420
    %p422 = pneg %p421
    // Predicated region
    $region57: #{mamba_block_forward.2} parent=5 // pred_check
      _
    $region58: #{mamba_block_forward.2} parent=5 // pred_check_branch
      %424 = sbr.rel (%p421) target = $region60
    $region59: #{mamba_block_forward.2} parent=5 // pred_region
      %s425 = ssub.s32 %s21, 1
      %p426 = scmp.lt.s32.totalorder %s26, 1
      %s427 = scalar_select %p426, %s26, 1
      %s428 = smul.addr %s427, 8
      %s429 = scalar_lea.vmem %s0, %s428
      %p430 = pneg %p47
      %p431 = pneg %p44
      %p432 = pneg %p68
      %p433 = pneg %p65
      %p434 = pneg %p89
      %p435 = pneg %p86
      %p436 = pneg %p110
      %p437 = pneg %p107
      %p438 = pneg %p131
      %p439 = pneg %p128
      %p440 = pneg %p152
      %p441 = pneg %p149
      %p442 = pneg %p173
      %p443 = pneg %p170
      %p444 = pneg %p194
      %p445 = pneg %p191
      %p446 = pneg %p215
      %p447 = pneg %p212
      %p448 = pneg %p236
      %p449 = pneg %p233
      %p450 = pneg %p262
      %p451 = pneg %p259
      %p452 = scmp.lt.s32.totalorder %s26, 1
      %s453 = scalar_select %p452, %s26, 1
      %s454 = smul.addr %s453, 8
      %s455 = scalar_lea.vmem %s10, %s454
      %p456 = pneg %p288
      %p457 = pneg %p285
      %p458 = scmp.lt.s32.totalorder %s26, 1
      %s459 = scalar_select %p458, %s26, 1
      %s460 = smul.addr %s459, 8
      %s461 = scalar_lea.vmem %s11, %s460
      %p462 = pneg %p314
      %p463 = pneg %p311
      %p464 = scmp.lt.s32.totalorder %s26, 1
      %s465 = scalar_select %p464, %s26, 1
      %s466 = smul.addr %s465, 8
      %s467 = scalar_lea.vmem %s12, %s466
      %p468 = pneg %p340
      %p469 = pneg %p337
      %p470 = scmp.lt.s32.totalorder %s26, 1
      %s471 = scalar_select %p470, %s26, 1
      %s472 = smul.addr %s471, 8
      %s473 = scalar_lea.vmem %s13, %s472
      %p474 = pneg %p366
      %p475 = pneg %p363
      %p476 = scmp.lt.s32.totalorder %s26, 1
      %s477 = scalar_select %p476, %s26, 1
      %s478 = smul.addr %s477, 8
      %s479 = scalar_lea.vmem %s14, %s478
      %p480 = scmp.lt.s32.totalorder %s26, 1
      %s481 = scalar_select %p480, %s26, 1
      %s482 = smul.addr %s481, 8
      %s483 = scalar_lea.vmem %s0, %s482
      %p484 = scmp.lt.s32.totalorder %s26, 1
      %s485 = scalar_select %p484, %s26, 1
      %s486 = smul.addr %s485, 8
      %s487 = scalar_lea.vmem %s10, %s486
      %p488 = scmp.lt.s32.totalorder %s26, 1
      %s489 = scalar_select %p488, %s26, 1
      %s490 = smul.addr %s489, 8
      %s491 = scalar_lea.vmem %s11, %s490
      %p492 = scmp.lt.s32.totalorder %s26, 1
      %s493 = scalar_select %p492, %s26, 1
      %s494 = smul.addr %s493, 8
      %s495 = scalar_lea.vmem %s12, %s494
      %p496 = scmp.lt.s32.totalorder %s26, 1
      %s497 = scalar_select %p496, %s26, 1
      %s498 = smul.addr %s497, 8
      %s499 = scalar_lea.vmem %s13, %s498
      %p500 = scmp.lt.s32.totalorder %s26, 1
      %s501 = scalar_select %p500, %s26, 1
      %s502 = smul.addr %s501, 8
      %s503 = scalar_lea.vmem %s14, %s502
      %v504 = vld [vmem:[%s483] sm:$0xff]
      %v505 = vld [vmem:[%s1] sm:$0xff]
      %v506 = vld [vmem:[%s1 + $0x8] sm:$0xff]
      %v507 = vld [vmem:[%s1 + $0x10] sm:$0xff]
      %v508 = vld [vmem:[%s1 + $0x18] sm:$0xff]
      %vm509 = vcmask 261120
      %v511 = vsel %vm509, %v504, 0
      %513 = vmatprep.subr.mxu0 0.0
      %514 = vmatpush1.msra.mxu0 0.0
      %515 = vmatprep.subr.mxu0 0.0
      %516 = vmatpush1.msra.mxu0 0.0
      %517 = vmatprep.subr.mxu0 0.0
      %518 = vmatpush1.msra.mxu0 0.0
      %519 = vmatprep.subr.mxu0 0.0
      %520 = vmatpush1.msra.mxu0 0.0
      %521 = vmatprep.subr.mxu0 0.0
      %522 = vmatpush1.msra.mxu0 0.0
      %523 = vmatprep.subr.mxu0 0.0
      %524 = vmatpush1.msra.mxu0 0.0
      %525 = vmatprep.subr.mxu0 0.0
      %526 = vmatpush1.msra.mxu0 0.0
      %527 = vmatprep.subr.mxu0 0.0
      %528 = vmatpush1.msra.mxu0 0.0
      %529 = vmatprep.subr.mxu0 0.0
      %530 = vmatpush1.msra.mxu0 0.0
      %531 = vmatprep.subr.mxu0 0.0
      %532 = vmatpush1.msra.mxu0 0.0
      %533 = vmatprep.subr.mxu0 0.0
      %534 = vmatpush1.msra.mxu0 0.0
      %535 = vmatprep.subr.mxu0 0.0
      %536 = vmatpush1.msra.mxu0 0.0
      %537 = vmatprep.subr.mxu0 0.0
      %538 = vmatpush1.msra.mxu0 %v508
      %539 = vmatprep.subr.mxu0 0.0
      %540 = vmatpush1.msra.mxu0 %v507
      %541 = vmatprep.subr.mxu0 0.0
      %542 = vmatpush1.msra.mxu0 %v506
      %543 = vmatprep.subr.mxu0 0.0
      %544 = vmatpush1.msra.mxu0 %v505
      %545 = vmatprep.subr.mxu0 0.0
      %546 = vmatpush2.msra.mxu0 0.0
      %547 = vmatprep.subr.mxu0 0.0
      %548 = vmatpush2.msra.mxu0 0.0
      %549 = vmatprep.subr.mxu0 0.0
      %550 = vmatpush2.msra.mxu0 0.0
      %551 = vmatprep.subr.mxu0 0.0
      %552 = vmatpush2.msra.mxu0 0.0
      %553 = vmatprep.subr.mxu0 0.0
      %554 = vmatpush2.msra.mxu0 0.0
      %555 = vmatprep.subr.mxu0 0.0
      %556 = vmatpush2.msra.mxu0 0.0
      %557 = vmatprep.subr.mxu0 0.0
      %558 = vmatpush2.msra.mxu0 0.0
      %559 = vmatprep.subr.mxu0 0.0
      %560 = vmatpush2.msra.mxu0 0.0
      %561 = vmatprep.subr.mxu0 0.0
      %562 = vmatpush2.msra.mxu0 0.0
      %563 = vmatprep.subr.mxu0 0.0
      %564 = vmatpush2.msra.mxu0 0.0
      %565 = vmatprep.subr.mxu0 0.0
      %566 = vmatpush2.msra.mxu0 0.0
      %567 = vmatprep.subr.mxu0 0.0
      %568 = vmatpush2.msra.mxu0 0.0
      %569 = vmatprep.subr.mxu0 0.0
      %570 = vmatpush2.msra.mxu0 0.0
      %571 = vmatprep.subr.mxu0 0.0
      %572 = vmatpush2.msra.mxu0 0.0
      %573 = vmatprep.subr.mxu0 0.0
      %574 = vmatpush2.msra.mxu0 0.0
      %575 = vmatprep.subr.mxu0 0.0
      %576 = vmatpush2.msra.mxu0 0.0
      %577 = vmatprep.mubr.f32.mxu0 0.0
      %578 = vmatmul.mubr.f32.gmra.mxu0 %v511
      %v579 = vpop.f32.mrf.mxu0
      %v580 = vadd.f32 0.0, %v579
      %v581 = vpop.f32.mrf.mxu0
      %582 = vdwg.mxu0
      %v583 = vld [vmem:[%s2] sm:$0xff]
      %v584 = vld [vmem:[%s2 + $0x8] sm:$0xff]
      %v585 = vld [vmem:[%s2 + $0x10] sm:$0xff]
      %v586 = vld [vmem:[%s2 + $0x18] sm:$0xff]
      %587 = vmatprep.subr.mxu0 0.0
      %588 = vmatpush1.msra.mxu0 0.0
      %589 = vmatprep.subr.mxu0 0.0
      %590 = vmatpush1.msra.mxu0 0.0
      %591 = vmatprep.subr.mxu0 0.0
      %592 = vmatpush1.msra.mxu0 0.0
      %593 = vmatprep.subr.mxu0 0.0
      %594 = vmatpush1.msra.mxu0 0.0
      %595 = vmatprep.subr.mxu0 0.0
      %596 = vmatpush1.msra.mxu0 0.0
      %597 = vmatprep.subr.mxu0 0.0
      %598 = vmatpush1.msra.mxu0 0.0
      %599 = vmatprep.subr.mxu0 0.0
      %600 = vmatpush1.msra.mxu0 0.0
      %601 = vmatprep.subr.mxu0 0.0
      %602 = vmatpush1.msra.mxu0 0.0
      %603 = vmatprep.subr.mxu0 0.0
      %604 = vmatpush1.msra.mxu0 0.0
      %605 = vmatprep.subr.mxu0 0.0
      %606 = vmatpush1.msra.mxu0 0.0
      %607 = vmatprep.subr.mxu0 0.0
      %608 = vmatpush1.msra.mxu0 0.0
      %609 = vmatprep.subr.mxu0 0.0
      %610 = vmatpush1.msra.mxu0 0.0
      %611 = vmatprep.subr.mxu0 0.0
      %612 = vmatpush1.msra.mxu0 %v586
      %613 = vmatprep.subr.mxu0 0.0
      %614 = vmatpush1.msra.mxu0 %v585
      %615 = vmatprep.subr.mxu0 0.0
      %616 = vmatpush1.msra.mxu0 %v584
      %617 = vmatprep.subr.mxu0 0.0
      %618 = vmatpush1.msra.mxu0 %v583
      %619 = vmatprep.subr.mxu0 0.0
      %620 = vmatpush2.msra.mxu0 0.0
      %621 = vmatprep.subr.mxu0 0.0
      %622 = vmatpush2.msra.mxu0 0.0
      %623 = vmatprep.subr.mxu0 0.0
      %624 = vmatpush2.msra.mxu0 0.0
      %625 = vmatprep.subr.mxu0 0.0
      %626 = vmatpush2.msra.mxu0 0.0
      %627 = vmatprep.subr.mxu0 0.0
      %628 = vmatpush2.msra.mxu0 0.0
      %629 = vmatprep.subr.mxu0 0.0
      %630 = vmatpush2.msra.mxu0 0.0
      %631 = vmatprep.subr.mxu0 0.0
      %632 = vmatpush2.msra.mxu0 0.0
      %633 = vmatprep.subr.mxu0 0.0
      %634 = vmatpush2.msra.mxu0 0.0
      %635 = vmatprep.subr.mxu0 0.0
      %636 = vmatpush2.msra.mxu0 0.0
      %637 = vmatprep.subr.mxu0 0.0
      %638 = vmatpush2.msra.mxu0 0.0
      %639 = vmatprep.subr.mxu0 0.0
      %640 = vmatpush2.msra.mxu0 0.0
      %641 = vmatprep.subr.mxu0 0.0
      %642 = vmatpush2.msra.mxu0 0.0
      %643 = vmatprep.subr.mxu0 0.0
      %644 = vmatpush2.msra.mxu0 0.0
      %645 = vmatprep.subr.mxu0 0.0
      %646 = vmatpush2.msra.mxu0 0.0
      %647 = vmatprep.subr.mxu0 0.0
      %648 = vmatpush2.msra.mxu0 0.0
      %649 = vmatprep.subr.mxu0 0.0
      %650 = vmatpush2.msra.mxu0 0.0
      %651 = vmatprep.mubr.f32.mxu0 0.0
      %652 = vmatmul.mubr.f32.gmra.mxu0 %v511
      %v653 = vpop.f32.mrf.mxu0
      %v654 = vadd.f32 0.0, %v653
      %v655 = vpop.f32.mrf.mxu0
      %656 = vdwg.mxu0
      %vm657 = vcmask 256000
      %658 = vst.msk [vmem:[#allocation2] sm:$0x7] %vm657, 0.0
      %659 = vst.msk [vmem:[#allocation2 + $0x3] sm:$0xff] %vm509, %v580
      %v660 = vld [vmem:[%s3] sm:$0xf]
      %v661 = vld [vmem:[#allocation2] sm:$0xff]
      %v662 = vlaneseq
      %v663 = vshrl.u32 %v662, 7
      %v664 = vsub.s32 0, %v663
      %v665 = vrot.slane %v660, %v664
      %v666 = vmul.f32 %v665, %v661
      %v667 = vadd.f32 %v666, 0.0
      %v668 = vld [vmem:[#allocation2 + $0x1] sm:$0xff]
      %v669 = vlaneseq
      %v670 = vshrl.u32 %v669, 7
      %v671 = vsub.s32 1, %v670
      %v672 = vrot.slane %v660, %v671
      %v673 = vmul.f32 %v672, %v668
      %v674 = vadd.f32 %v667, %v673
      %v675 = vld [vmem:[#allocation2 + $0x2] sm:$0xff]
      %v676 = vlaneseq
      %v677 = vshrl.u32 %v676, 7
      %v678 = vsub.s32 2, %v677
      %v679 = vrot.slane %v660, %v678
      %v680 = vmul.f32 %v679, %v675
      %v681 = vadd.f32 %v674, %v680
      %v682 = vld [vmem:[#allocation2 + $0x3] sm:$0xff]
      %v683 = vlaneseq
      %v684 = vshrl.u32 %v683, 7
      %v685 = vsub.s32 3, %v684
      %v686 = vrot.slane %v660, %v685
      %v687 = vmul.f32 %v686, %v682
      %v688 = vadd.f32 %v681, %v687
      %v689 = vld [vmem:[%s4] sm:$0x1]
      %v691 = vlaneseq
      %v692 = vshrl.u32 %v691, 7
      %v693 = vsub.s32 0, %v692
      %v694 = vrot.slane %v689, %v693
      %v696 = vadd.f32 %v688, %v694
      %v697 = vsub.f32 0.0, %v696
      %v698 = vmul.f32 %v697, 1.442695
      %v699 = vpow.pop %v698
      %v700 = vadd.f32 %v699, 1.0
      %v701 = vrcp.pop %v700
      %v702 = vmul.f32 %v696, %v701
      %v703 = vld [vmem:[%s5] sm:$0xff]
      %v704 = vld [vmem:[%s5 + $0x8] sm:$0xff]
      %v705 = vld [vmem:[%s5 + $0x10] sm:$0xff]
      %v706 = vld [vmem:[%s5 + $0x18] sm:$0xff]
      %v708 = vsel %vm509, %v702, 0
      %710 = vmatprep.subr.mxu0 0.0
      %711 = vmatpush1.msra.mxu0 0.0
      %712 = vmatprep.subr.mxu0 0.0
      %713 = vmatpush1.msra.mxu0 0.0
      %714 = vmatprep.subr.mxu0 0.0
      %715 = vmatpush1.msra.mxu0 0.0
      %716 = vmatprep.subr.mxu0 0.0
      %717 = vmatpush1.msra.mxu0 0.0
      %718 = vmatprep.subr.mxu0 0.0
      %719 = vmatpush1.msra.mxu0 0.0
      %720 = vmatprep.subr.mxu0 0.0
      %721 = vmatpush1.msra.mxu0 0.0
      %722 = vmatprep.subr.mxu0 0.0
      %723 = vmatpush1.msra.mxu0 0.0
      %724 = vmatprep.subr.mxu0 0.0
      %725 = vmatpush1.msra.mxu0 0.0
      %726 = vmatprep.subr.mxu0 0.0
      %727 = vmatpush1.msra.mxu0 0.0
      %728 = vmatprep.subr.mxu0 0.0
      %729 = vmatpush1.msra.mxu0 0.0
      %730 = vmatprep.subr.mxu0 0.0
      %731 = vmatpush1.msra.mxu0 0.0
      %732 = vmatprep.subr.mxu0 0.0
      %733 = vmatpush1.msra.mxu0 0.0
      %734 = vmatprep.subr.mxu0 0.0
      %735 = vmatpush1.msra.mxu0 %v706
      %736 = vmatprep.subr.mxu0 0.0
      %737 = vmatpush1.msra.mxu0 %v705
      %738 = vmatprep.subr.mxu0 0.0
      %739 = vmatpush1.msra.mxu0 %v704
      %740 = vmatprep.subr.mxu0 0.0
      %741 = vmatpush1.msra.mxu0 %v703
      %742 = vmatprep.subr.mxu0 0.0
      %743 = vmatpush2.msra.mxu0 0.0
      %744 = vmatprep.subr.mxu0 0.0
      %745 = vmatpush2.msra.mxu0 0.0
      %746 = vmatprep.subr.mxu0 0.0
      %747 = vmatpush2.msra.mxu0 0.0
      %748 = vmatprep.subr.mxu0 0.0
      %749 = vmatpush2.msra.mxu0 0.0
      %750 = vmatprep.subr.mxu0 0.0
      %751 = vmatpush2.msra.mxu0 0.0
      %752 = vmatprep.subr.mxu0 0.0
      %753 = vmatpush2.msra.mxu0 0.0
      %754 = vmatprep.subr.mxu0 0.0
      %755 = vmatpush2.msra.mxu0 0.0
      %756 = vmatprep.subr.mxu0 0.0
      %757 = vmatpush2.msra.mxu0 0.0
      %758 = vmatprep.subr.mxu0 0.0
      %759 = vmatpush2.msra.mxu0 0.0
      %760 = vmatprep.subr.mxu0 0.0
      %761 = vmatpush2.msra.mxu0 0.0
      %762 = vmatprep.subr.mxu0 0.0
      %763 = vmatpush2.msra.mxu0 0.0
      %764 = vmatprep.subr.mxu0 0.0
      %765 = vmatpush2.msra.mxu0 0.0
      %766 = vmatprep.subr.mxu0 0.0
      %767 = vmatpush2.msra.mxu0 0.0
      %768 = vmatprep.subr.mxu0 0.0
      %769 = vmatpush2.msra.mxu0 0.0
      %770 = vmatprep.subr.mxu0 0.0
      %771 = vmatpush2.msra.mxu0 0.0
      %772 = vmatprep.subr.mxu0 0.0
      %773 = vmatpush2.msra.mxu0 0.0
      %774 = vmatprep.mubr.f32.mxu0 0.0
      %775 = vmatmul.mubr.f32.gmra.mxu0 %v708
      %v776 = vpop.f32.mrf.mxu0
      %v777 = vadd.f32 0.0, %v776
      %v778 = vpop.f32.mrf.mxu0
      %779 = vdwg.mxu0
      %v780 = vld [vmem:[%s6] sm:$0xff]
      %v781 = vld [vmem:[%s6 + $0x8] sm:$0xff]
      %v782 = vld [vmem:[%s6 + $0x10] sm:$0xff]
      %v783 = vld [vmem:[%s6 + $0x18] sm:$0xff]
      %784 = vmatprep.subr.mxu0 0.0
      %785 = vmatpush1.msra.mxu0 0.0
      %786 = vmatprep.subr.mxu0 0.0
      %787 = vmatpush1.msra.mxu0 0.0
      %788 = vmatprep.subr.mxu0 0.0
      %789 = vmatpush1.msra.mxu0 0.0
      %790 = vmatprep.subr.mxu0 0.0
      %791 = vmatpush1.msra.mxu0 0.0
      %792 = vmatprep.subr.mxu0 0.0
      %793 = vmatpush1.msra.mxu0 0.0
      %794 = vmatprep.subr.mxu0 0.0
      %795 = vmatpush1.msra.mxu0 0.0
      %796 = vmatprep.subr.mxu0 0.0
      %797 = vmatpush1.msra.mxu0 0.0
      %798 = vmatprep.subr.mxu0 0.0
      %799 = vmatpush1.msra.mxu0 0.0
      %800 = vmatprep.subr.mxu0 0.0
      %801 = vmatpush1.msra.mxu0 0.0
      %802 = vmatprep.subr.mxu0 0.0
      %803 = vmatpush1.msra.mxu0 0.0
      %804 = vmatprep.subr.mxu0 0.0
      %805 = vmatpush1.msra.mxu0 0.0
      %806 = vmatprep.subr.mxu0 0.0
      %807 = vmatpush1.msra.mxu0 0.0
      %808 = vmatprep.subr.mxu0 0.0
      %809 = vmatpush1.msra.mxu0 %v783
      %810 = vmatprep.subr.mxu0 0.0
      %811 = vmatpush1.msra.mxu0 %v782
      %812 = vmatprep.subr.mxu0 0.0
      %813 = vmatpush1.msra.mxu0 %v781
      %814 = vmatprep.subr.mxu0 0.0
      %815 = vmatpush1.msra.mxu0 %v780
      %816 = vmatprep.subr.mxu0 0.0
      %817 = vmatpush2.msra.mxu0 0.0
      %818 = vmatprep.subr.mxu0 0.0
      %819 = vmatpush2.msra.mxu0 0.0
      %820 = vmatprep.subr.mxu0 0.0
      %821 = vmatpush2.msra.mxu0 0.0
      %822 = vmatprep.subr.mxu0 0.0
      %823 = vmatpush2.msra.mxu0 0.0
      %824 = vmatprep.subr.mxu0 0.0
      %825 = vmatpush2.msra.mxu0 0.0
      %826 = vmatprep.subr.mxu0 0.0
      %827 = vmatpush2.msra.mxu0 0.0
      %828 = vmatprep.subr.mxu0 0.0
      %829 = vmatpush2.msra.mxu0 0.0
      %830 = vmatprep.subr.mxu0 0.0
      %831 = vmatpush2.msra.mxu0 0.0
      %832 = vmatprep.subr.mxu0 0.0
      %833 = vmatpush2.msra.mxu0 0.0
      %834 = vmatprep.subr.mxu0 0.0
      %835 = vmatpush2.msra.mxu0 0.0
      %836 = vmatprep.subr.mxu0 0.0
      %837 = vmatpush2.msra.mxu0 0.0
      %838 = vmatprep.subr.mxu0 0.0
      %839 = vmatpush2.msra.mxu0 0.0
      %840 = vmatprep.subr.mxu0 0.0
      %841 = vmatpush2.msra.mxu0 0.0
      %842 = vmatprep.subr.mxu0 0.0
      %843 = vmatpush2.msra.mxu0 0.0
      %844 = vmatprep.subr.mxu0 0.0
      %845 = vmatpush2.msra.mxu0 0.0
      %846 = vmatprep.subr.mxu0 0.0
      %847 = vmatpush2.msra.mxu0 0.0
      %848 = vmatprep.mubr.f32.mxu0 0.0
      %849 = vmatmul.mubr.f32.gmra.mxu0 %v708
      %v850 = vpop.f32.mrf.mxu0
      %v851 = vadd.f32 0.0, %v850
      %v852 = vpop.f32.mrf.mxu0
      %853 = vdwg.mxu0
      %v854 = vld [vmem:[%s7] sm:$0xff]
      %v855 = vld [vmem:[%s7 + $0x8] sm:$0xff]
      %v856 = vld [vmem:[%s7 + $0x10] sm:$0xff]
      %v857 = vld [vmem:[%s7 + $0x18] sm:$0xff]
      %858 = vmatprep.subr.mxu0 0.0
      %859 = vmatpush1.msra.mxu0 0.0
      %860 = vmatprep.subr.mxu0 0.0
      %861 = vmatpush1.msra.mxu0 0.0
      %862 = vmatprep.subr.mxu0 0.0
      %863 = vmatpush1.msra.mxu0 0.0
      %864 = vmatprep.subr.mxu0 0.0
      %865 = vmatpush1.msra.mxu0 0.0
      %866 = vmatprep.subr.mxu0 0.0
      %867 = vmatpush1.msra.mxu0 0.0
      %868 = vmatprep.subr.mxu0 0.0
      %869 = vmatpush1.msra.mxu0 0.0
      %870 = vmatprep.subr.mxu0 0.0
      %871 = vmatpush1.msra.mxu0 0.0
      %872 = vmatprep.subr.mxu0 0.0
      %873 = vmatpush1.msra.mxu0 0.0
      %874 = vmatprep.subr.mxu0 0.0
      %875 = vmatpush1.msra.mxu0 0.0
      %876 = vmatprep.subr.mxu0 0.0
      %877 = vmatpush1.msra.mxu0 0.0
      %878 = vmatprep.subr.mxu0 0.0
      %879 = vmatpush1.msra.mxu0 0.0
      %880 = vmatprep.subr.mxu0 0.0
      %881 = vmatpush1.msra.mxu0 0.0
      %882 = vmatprep.subr.mxu0 0.0
      %883 = vmatpush1.msra.mxu0 %v857
      %884 = vmatprep.subr.mxu0 0.0
      %885 = vmatpush1.msra.mxu0 %v856
      %886 = vmatprep.subr.mxu0 0.0
      %887 = vmatpush1.msra.mxu0 %v855
      %888 = vmatprep.subr.mxu0 0.0
      %889 = vmatpush1.msra.mxu0 %v854
      %890 = vmatprep.subr.mxu0 0.0
      %891 = vmatpush2.msra.mxu0 0.0
      %892 = vmatprep.subr.mxu0 0.0
      %893 = vmatpush2.msra.mxu0 0.0
      %894 = vmatprep.subr.mxu0 0.0
      %895 = vmatpush2.msra.mxu0 0.0
      %896 = vmatprep.subr.mxu0 0.0
      %897 = vmatpush2.msra.mxu0 0.0
      %898 = vmatprep.subr.mxu0 0.0
      %899 = vmatpush2.msra.mxu0 0.0
      %900 = vmatprep.subr.mxu0 0.0
      %901 = vmatpush2.msra.mxu0 0.0
      %902 = vmatprep.subr.mxu0 0.0
      %903 = vmatpush2.msra.mxu0 0.0
      %904 = vmatprep.subr.mxu0 0.0
      %905 = vmatpush2.msra.mxu0 0.0
      %906 = vmatprep.subr.mxu0 0.0
      %907 = vmatpush2.msra.mxu0 0.0
      %908 = vmatprep.subr.mxu0 0.0
      %909 = vmatpush2.msra.mxu0 0.0
      %910 = vmatprep.subr.mxu0 0.0
      %911 = vmatpush2.msra.mxu0 0.0
      %912 = vmatprep.subr.mxu0 0.0
      %913 = vmatpush2.msra.mxu0 0.0
      %914 = vmatprep.subr.mxu0 0.0
      %915 = vmatpush2.msra.mxu0 0.0
      %916 = vmatprep.subr.mxu0 0.0
      %917 = vmatpush2.msra.mxu0 0.0
      %918 = vmatprep.subr.mxu0 0.0
      %919 = vmatpush2.msra.mxu0 0.0
      %920 = vmatprep.subr.mxu0 0.0
      %921 = vmatpush2.msra.mxu0 0.0
      %922 = vmatprep.mubr.f32.mxu0 0.0
      %923 = vmatmul.mubr.f32.gmra.mxu0 %v708
      %v924 = vpop.f32.mrf.mxu0
      %v925 = vadd.f32 0.0, %v924
      %v926 = vpop.f32.mrf.mxu0
      %927 = vdwg.mxu0
      %v928 = vld [vmem:[%s8] sm:$0x3]
      %vm929 = vcmask 15360
      %v931 = vsel %vm929, %v925, 0
      %vm933 = vcmask 1041408
      %v935 = vsel %vm933, %v928, 0
      %937 = vmatprep.subr.mxu0 0.0
      %938 = vmatpush1.msra.mxu0 0.0
      %939 = vmatprep.subr.mxu0 0.0
      %940 = vmatpush1.msra.mxu0 0.0
      %941 = vmatprep.subr.mxu0 0.0
      %942 = vmatpush1.msra.mxu0 0.0
      %943 = vmatprep.subr.mxu0 0.0
      %944 = vmatpush1.msra.mxu0 0.0
      %945 = vmatprep.subr.mxu0 0.0
      %946 = vmatpush1.msra.mxu0 0.0
      %947 = vmatprep.subr.mxu0 0.0
      %948 = vmatpush1.msra.mxu0 0.0
      %949 = vmatprep.subr.mxu0 0.0
      %950 = vmatpush1.msra.mxu0 0.0
      %951 = vmatprep.subr.mxu0 0.0
      %952 = vmatpush1.msra.mxu0 0.0
      %953 = vmatprep.subr.mxu0 0.0
      %954 = vmatpush1.msra.mxu0 0.0
      %955 = vmatprep.subr.mxu0 0.0
      %956 = vmatpush1.msra.mxu0 0.0
      %957 = vmatprep.subr.mxu0 0.0
      %958 = vmatpush1.msra.mxu0 0.0
      %959 = vmatprep.subr.mxu0 0.0
      %960 = vmatpush1.msra.mxu0 0.0
      %961 = vmatprep.subr.mxu0 0.0
      %962 = vmatpush1.msra.mxu0 0.0
      %963 = vmatprep.subr.mxu0 0.0
      %964 = vmatpush1.msra.mxu0 0.0
      %965 = vmatprep.subr.mxu0 0.0
      %966 = vmatpush1.msra.mxu0 0.0
      %967 = vmatprep.subr.mxu0 0.0
      %968 = vmatpush1.msra.mxu0 %v935
      %969 = vmatprep.subr.mxu0 0.0
      %970 = vmatpush2.msra.mxu0 0.0
      %971 = vmatprep.subr.mxu0 0.0
      %972 = vmatpush2.msra.mxu0 0.0
      %973 = vmatprep.subr.mxu0 0.0
      %974 = vmatpush2.msra.mxu0 0.0
      %975 = vmatprep.subr.mxu0 0.0
      %976 = vmatpush2.msra.mxu0 0.0
      %977 = vmatprep.subr.mxu0 0.0
      %978 = vmatpush2.msra.mxu0 0.0
      %979 = vmatprep.subr.mxu0 0.0
      %980 = vmatpush2.msra.mxu0 0.0
      %981 = vmatprep.subr.mxu0 0.0
      %982 = vmatpush2.msra.mxu0 0.0
      %983 = vmatprep.subr.mxu0 0.0
      %984 = vmatpush2.msra.mxu0 0.0
      %985 = vmatprep.subr.mxu0 0.0
      %986 = vmatpush2.msra.mxu0 0.0
      %987 = vmatprep.subr.mxu0 0.0
      %988 = vmatpush2.msra.mxu0 0.0
      %989 = vmatprep.subr.mxu0 0.0
      %990 = vmatpush2.msra.mxu0 0.0
      %991 = vmatprep.subr.mxu0 0.0
      %992 = vmatpush2.msra.mxu0 0.0
      %993 = vmatprep.subr.mxu0 0.0
      %994 = vmatpush2.msra.mxu0 0.0
      %995 = vmatprep.subr.mxu0 0.0
      %996 = vmatpush2.msra.mxu0 0.0
      %997 = vmatprep.subr.mxu0 0.0
      %998 = vmatpush2.msra.mxu0 0.0
      %999 = vmatprep.subr.mxu0 0.0
      %1000 = vmatpush2.msra.mxu0 0.0
      %1001 = vmatprep.mubr.f32.mxu0 0.0
      %1002 = vmatmul.mubr.f32.gmra.mxu0 %v931
      %v1003 = vpop.f32.mrf.mxu0
      %v1004 = vadd.f32 0.0, %v1003
      %v1005 = vpop.f32.mrf.mxu0
      %1006 = vdwg.mxu0
      %v1007 = vld [vmem:[%s9] sm:$0x1]
      %v1009 = vlaneseq
      %v1010 = vshrl.u32 %v1009, 7
      %v1011 = vsub.s32 0, %v1010
      %v1012 = vrot.slane %v1007, %v1011
      %v1014 = vadd.f32 %v1012, %v1004
      %v1015 = vmax.f32 %v1014, 0.0
      %v1016 = vand.u32 2147483647, %v1014
      %v1017 = vsub.f32 0.0, %v1016
      %v1018 = vmul.f32 %v1017, 1.442695
      %v1019 = vpow.pop %v1018
      %v1020 = vadd.f32 %v1019, 1.0
      %v1021 = vlog2.pop %v1020
      %v1022 = vmul.f32 %v1021, 0.6931472
      %v1023 = vadd.f32 %v1015, %v1022
      %1024 = vst.msk [vmem:[%s487] sm:$0xff] %vm509, %v702
      %v1025 = vsub.f32 0.0, %v654
      %v1026 = vmul.f32 %v1025, 1.442695
      %v1027 = vpow.pop %v1026
      %v1028 = vadd.f32 %v1027, 1.0
      %v1029 = vrcp.pop %v1028
      %v1030 = vmul.f32 %v654, %v1029
      %1031 = vst.msk [vmem:[%s491] sm:$0xff] %vm509, %v1030
      %1032 = vst.msk [vmem:[%s495] sm:$0xff] %vm509, %v1023
      %vm1033 = vcmask 130048
      %1034 = vst.msk [vmem:[%s499] sm:$0xff] %vm1033, %v777
      %1035 = vst.msk [vmem:[%s503] sm:$0xff] %vm1033, %v851
      %p1036 = scmp.lt.s32.totalorder %s26, 1
      %s1037 = scalar_select %p1036, %s26, 1
      %s1038 = smul.addr %s1037, 8
      %s1039 = scalar_lea.vmem %s10, %s1038
      %p1040 = scmp.lt.s32.totalorder %s26, 1
      %s1041 = scalar_select %p1040, %s26, 1
      %s1042 = smul.addr %s1041, 8
      %s1043 = scalar_lea.vmem %s11, %s1042
      %p1044 = scmp.lt.s32.totalorder %s26, 1
      %s1045 = scalar_select %p1044, %s26, 1
      %s1046 = smul.addr %s1045, 8
      %s1047 = scalar_lea.vmem %s12, %s1046
      %p1048 = scmp.lt.s32.totalorder %s26, 1
      %s1049 = scalar_select %p1048, %s26, 1
      %s1050 = smul.addr %s1049, 8
      %s1051 = scalar_lea.vmem %s13, %s1050
      %p1052 = scmp.lt.s32.totalorder %s26, 1
      %s1053 = scalar_select %p1052, %s26, 1
      %s1054 = smul.addr %s1053, 8
      %s1055 = scalar_lea.vmem %s14, %s1054
      // Predicated region
      $region61: #{mamba_block_forward.2} parent=59 // pred_check
        %p1056 = pneg %p259
      $region62: #{mamba_block_forward.2} parent=59 // pred_check_branch
        %1058 = sbr.rel (%p1056) target = $region64
      $region63: #{mamba_block_forward.2} parent=59 // pred_region
        _
      $region64: #{mamba_block_forward.2} parent=59 // pred_fallthru
        _
      // Predicated region
      $region65: #{mamba_block_forward.2} parent=59 // pred_check
        %p1059 = pneg %p285
      $region66: #{mamba_block_forward.2} parent=59 // pred_check_branch
        %1061 = sbr.rel (%p1059) target = $region68
      $region67: #{mamba_block_forward.2} parent=59 // pred_region
        _
      $region68: #{mamba_block_forward.2} parent=59 // pred_fallthru
        _
      // Predicated region
      $region69: #{mamba_block_forward.2} parent=59 // pred_check
        %p1062 = pneg %p311
      $region70: #{mamba_block_forward.2} parent=59 // pred_check_branch
        %1064 = sbr.rel (%p1062) target = $region72
      $region71: #{mamba_block_forward.2} parent=59 // pred_region
        _
      $region72: #{mamba_block_forward.2} parent=59 // pred_fallthru
        _
      // Predicated region
      $region73: #{mamba_block_forward.2} parent=59 // pred_check
        %p1065 = pneg %p337
      $region74: #{mamba_block_forward.2} parent=59 // pred_check_branch
        %1067 = sbr.rel (%p1065) target = $region76
      $region75: #{mamba_block_forward.2} parent=59 // pred_region
        _
      $region76: #{mamba_block_forward.2} parent=59 // pred_fallthru
        _
      // Predicated region
      $region77: #{mamba_block_forward.2} parent=59 // pred_check
        %p1068 = pneg %p363
      $region78: #{mamba_block_forward.2} parent=59 // pred_check_branch
        %1070 = sbr.rel (%p1068) target = $region80
      $region79: #{mamba_block_forward.2} parent=59 // pred_region
        _
      $region80: #{mamba_block_forward.2} parent=59 // pred_fallthru
        _
    $region60: #{mamba_block_forward.2} parent=5 // pred_fallthru
      _
    %p1071 = scmp.le.s32.totalorder 2, %s21
    // Predicated region
    $region81: #{mamba_block_forward.2} parent=5 // pred_check
      %p1072 = pneg %p1071
    $region82: #{mamba_block_forward.2} parent=5 // pred_check_branch
      %1074 = sbr.rel (%p1072) target = $region84
    $region83: #{mamba_block_forward.2} parent=5 // pred_region
      %s1075 = ssub.s32 %s21, 2
      // Predicated region
      $region85: #{mamba_block_forward.2} parent=83 // pred_check
        %p1076 = pneg %p265
      $region86: #{mamba_block_forward.2} parent=83 // pred_check_branch
        %1078 = sbr.rel (%p1076) target = $region88
      $region87: #{mamba_block_forward.2} parent=83 // pred_region
        %p1079 = scmp.lt.s32.totalorder %s27, 1
        %s1080 = scalar_select %p1079, %s27, 1
        %s1081 = smul.addr %s1080, 8
        %s1082 = scalar_lea.vmem %s10, %s1081
      $region88: #{mamba_block_forward.2} parent=83 // pred_fallthru
        _
      // Predicated region
      $region89: #{mamba_block_forward.2} parent=83 // pred_check
        %p1083 = pneg %p291
      $region90: #{mamba_block_forward.2} parent=83 // pred_check_branch
        %1085 = sbr.rel (%p1083) target = $region92
      $region91: #{mamba_block_forward.2} parent=83 // pred_region
        %p1086 = scmp.lt.s32.totalorder %s27, 1
        %s1087 = scalar_select %p1086, %s27, 1
        %s1088 = smul.addr %s1087, 8
        %s1089 = scalar_lea.vmem %s11, %s1088
      $region92: #{mamba_block_forward.2} parent=83 // pred_fallthru
        _
      // Predicated region
      $region93: #{mamba_block_forward.2} parent=83 // pred_check
        %p1090 = pneg %p317
      $region94: #{mamba_block_forward.2} parent=83 // pred_check_branch
        %1092 = sbr.rel (%p1090) target = $region96
      $region95: #{mamba_block_forward.2} parent=83 // pred_region
        %p1093 = scmp.lt.s32.totalorder %s27, 1
        %s1094 = scalar_select %p1093, %s27, 1
        %s1095 = smul.addr %s1094, 8
        %s1096 = scalar_lea.vmem %s12, %s1095
      $region96: #{mamba_block_forward.2} parent=83 // pred_fallthru
        _
      // Predicated region
      $region97: #{mamba_block_forward.2} parent=83 // pred_check
        %p1097 = pneg %p343
      $region98: #{mamba_block_forward.2} parent=83 // pred_check_branch
        %1099 = sbr.rel (%p1097) target = $region100
      $region99: #{mamba_block_forward.2} parent=83 // pred_region
        %p1100 = scmp.lt.s32.totalorder %s27, 1
        %s1101 = scalar_select %p1100, %s27, 1
        %s1102 = smul.addr %s1101, 8
        %s1103 = scalar_lea.vmem %s13, %s1102
      $region100: #{mamba_block_forward.2} parent=83 // pred_fallthru
        _
      // Predicated region
      $region101: #{mamba_block_forward.2} parent=83 // pred_check
        %p1104 = pneg %p369
      $region102: #{mamba_block_forward.2} parent=83 // pred_check_branch
        %1106 = sbr.rel (%p1104) target = $region104
      $region103: #{mamba_block_forward.2} parent=83 // pred_region
        %p1107 = scmp.lt.s32.totalorder %s27, 1
        %s1108 = scalar_select %p1107, %s27, 1
        %s1109 = smul.addr %s1108, 8
        %s1110 = scalar_lea.vmem %s14, %s1109
      $region104: #{mamba_block_forward.2} parent=83 // pred_fallthru
        _
    $region84: #{mamba_block_forward.2} parent=5 // pred_fallthru
      _
  $region6: #{mamba_block_forward.2} parent=0 // loop_footer
    %s25 = sadd.s32 1, %s21
  $region7: #{mamba_block_forward.2} parent=0 // loop_footer_branch
    %20 = sbr.rel target = $region3
  $region8: #{mamba_block_forward.2} parent=0 // loop_exit
    _

// kernel: mamba_block_forward.3
$region0: #{mamba_block_forward.3}
  #allocation0 [shape = 'u32[]', space=smem, size = 0x4, offset = 0x4, fixed_abs, tag = 'smem constant byte address 0x4 - core index']
  #allocation1 [shape = 'u32[144,128]{1,0:T(1,128)}', space=vmem, size = 0x12000, scoped, tag = 'internal scratch']
  #allocation2 [shape = 'f32[16,32]{1,0:T(8,128)}', space=vmem, size = 0x2000, scoped, tag = 'scratch operand']
  #allocation3 [shape = 'f32[8,32]{1,0:T(8,128)}', space=vmem, size = 0x1000, scoped, tag = 'scratch operand']
  %s0 = inlined_call_operand.vmem [shape: f32[2,8,32], index: 0, kind: input, shape index: {}]
  %s1 = inlined_call_operand.vmem [shape: f32[2,8,32], index: 1, kind: input, shape index: {}]
  %s2 = inlined_call_operand.vmem [shape: f32[2,8,32], index: 2, kind: input, shape index: {}]
  %s3 = inlined_call_operand.vmem [shape: f32[2,8,16,1], index: 3, kind: input, shape index: {}]
  %s4 = inlined_call_operand.vmem [shape: f32[2,8,16], index: 4, kind: input, shape index: {}]
  %s5 = inlined_call_operand.vmem [shape: f32[16,32], index: 5, kind: input, shape index: {}]
  %s6 = inlined_call_operand.vmem [shape: f32[1,32], index: 6, kind: input, shape index: {}]
  %s7 = inlined_call_operand.vmem [shape: f32[32,32], index: 7, kind: input, shape index: {}]
  %s8 = inlined_call_operand.hbm [shape: f32[2,8,32], index: 8, kind: output, shape index: {}]
  %s9 = sld [smem:[#allocation0]]
  $region72: #{mamba_block_forward.3} parent=0
    _
  %s11 = ssub.s32 1, %s9
  %s12 = scalar_select 0, %s11, %s9
  $region1: #{mamba_block_forward.3} parent=0
    #allocation4 [shape = 'u8[8192]{0}', space=vmem, size = 0x2000, scoped, tag = 'output window, operand 0']
    #allocation5 [shape = 's32[2]{0}', space=sflag, size = 0x8, scoped, tag = 'scoped memory for mamba_block_forward.3']
    %13 = vsyncpa [#allocation5], 0
    %s14 = scalar_lea.sflag [#allocation5], 1
    %15 = vsyncpa %s14, 0
    loop: start=0, step=1, limit=4
    $region2: #{mamba_block_forward.3} parent=1 // loop_pre_header
      _
    $region3: #{mamba_block_forward.3} parent=1 // loop_header
      %s17 = sphi 0, %s21
      %p18 = scmp.ge.s32.totalorder %s17, 4
      %s27 = sphi 0, %s29
      %s30 = sphi 0, %s27
      %s31 = sphi 0, %s30
      %s47 = sphi 0, %s31
      %s53 = sphi 0, %s55
      %s56 = sphi 0, %s53
      %s57 = sphi 0, %s56
      %s73 = sphi 0, %s57
      %s79 = sphi 0, %s81
      %s82 = sphi 0, %s79
      %s83 = sphi 0, %s82
      %s99 = sphi 0, %s83
      %s105 = sphi 0, %s107
      %s108 = sphi 0, %s105
      %s109 = sphi 0, %s108
      %s125 = sphi 0, %s109
      %s131 = sphi 0, %s133
      %s134 = sphi 0, %s131
      %s135 = sphi 0, %s134
      %s151 = sphi 0, %s135
      %s155 = sphi 0, %s155
      %s157 = sphi 0, %s155
      %s158 = sphi 0, %s157
      %s172 = sphi 0, %s158
      %s176 = sphi 0, %s176
      %s178 = sphi 0, %s176
      %s179 = sphi 0, %s178
      %s193 = sphi 0, %s179
      %s197 = sphi 0, %s197
      %s199 = sphi 0, %s197
      %s200 = sphi 0, %s199
      %s214 = sphi 0, %s200
      %s220 = sphi 0, %s222
      %s223 = sphi 0, %s220
      %s224 = sphi 0, %s223
      %s240 = sphi 0, %s224
    $region4: #{mamba_block_forward.3} parent=1 // loop_header_branch
      %20 = sbr.rel (%p18) target = $region8
    $region5: #{mamba_block_forward.3} parent=1 // loop_body
      %s22 = ssub.s32 %s17, 1
      %s23 = ssub.s32 %s17, 2
      %s24 = sadd.s32 %s17, 1
      %s25 = ssub.s32 %s17, %s24
      %p26 = scmp.eq.s32.totalorder %s25, 0
      %s28 = sadd.s32 %s27, 1
      %s29 = scalar_select %p26, %s27, %s28
      %p32 = pneg %p26
      %p33 = scmp.eq.s32.totalorder %s17, 1
      %p34 = por %p32, %p33
      %p35 = scmp.ne.s32.totalorder %s27, %s30
      %p36 = scmp.eq.s32.totalorder %s17, 0
      %p37 = por %p35, %p36
      %p38 = scmp.ne.s32.totalorder %s27, %s30
      %p39 = scmp.eq.s32.totalorder %s22, 1
      %p40 = por %p38, %p39
      %p41 = scmp.ne.s32.totalorder %s30, %s31
      %p42 = scmp.eq.s32.totalorder %s22, 0
      %p43 = por %p41, %p42
      %p44 = scmp.ne.s32.totalorder %s30, %s31
      %p45 = scmp.eq.s32.totalorder %s23, 1
      %p46 = por %p44, %p45
      %p48 = scmp.ne.s32.totalorder %s31, %s47
      %p49 = scmp.eq.s32.totalorder %s23, 0
      %p50 = por %p48, %p49
      %s51 = ssub.s32 %s17, %s24
      %p52 = scmp.eq.s32.totalorder %s51, 0
      %s54 = sadd.s32 %s53, 1
      %s55 = scalar_select %p52, %s53, %s54
      %p58 = pneg %p52
      %p59 = scmp.eq.s32.totalorder %s17, 1
      %p60 = por %p58, %p59
      %p61 = scmp.ne.s32.totalorder %s53, %s56
      %p62 = scmp.eq.s32.totalorder %s17, 0
      %p63 = por %p61, %p62
      %p64 = scmp.ne.s32.totalorder %s53, %s56
      %p65 = scmp.eq.s32.totalorder %s22, 1
      %p66 = por %p64, %p65
      %p67 = scmp.ne.s32.totalorder %s56, %s57
      %p68 = scmp.eq.s32.totalorder %s22, 0
      %p69 = por %p67, %p68
      %p70 = scmp.ne.s32.totalorder %s56, %s57
      %p71 = scmp.eq.s32.totalorder %s23, 1
      %p72 = por %p70, %p71
      %p74 = scmp.ne.s32.totalorder %s57, %s73
      %p75 = scmp.eq.s32.totalorder %s23, 0
      %p76 = por %p74, %p75
      %s77 = ssub.s32 %s17, %s24
      %p78 = scmp.eq.s32.totalorder %s77, 0
      %s80 = sadd.s32 %s79, 1
      %s81 = scalar_select %p78, %s79, %s80
      %p84 = pneg %p78
      %p85 = scmp.eq.s32.totalorder %s17, 1
      %p86 = por %p84, %p85
      %p87 = scmp.ne.s32.totalorder %s79, %s82
      %p88 = scmp.eq.s32.totalorder %s17, 0
      %p89 = por %p87, %p88
      %p90 = scmp.ne.s32.totalorder %s79, %s82
      %p91 = scmp.eq.s32.totalorder %s22, 1
      %p92 = por %p90, %p91
      %p93 = scmp.ne.s32.totalorder %s82, %s83
      %p94 = scmp.eq.s32.totalorder %s22, 0
      %p95 = por %p93, %p94
      %p96 = scmp.ne.s32.totalorder %s82, %s83
      %p97 = scmp.eq.s32.totalorder %s23, 1
      %p98 = por %p96, %p97
      %p100 = scmp.ne.s32.totalorder %s83, %s99
      %p101 = scmp.eq.s32.totalorder %s23, 0
      %p102 = por %p100, %p101
      %s103 = ssub.s32 %s17, %s24
      %p104 = scmp.eq.s32.totalorder %s103, 0
      %s106 = sadd.s32 %s105, 1
      %s107 = scalar_select %p104, %s105, %s106
      %p110 = pneg %p104
      %p111 = scmp.eq.s32.totalorder %s17, 1
      %p112 = por %p110, %p111
      %p113 = scmp.ne.s32.totalorder %s105, %s108
      %p114 = scmp.eq.s32.totalorder %s17, 0
      %p115 = por %p113, %p114
      %p116 = scmp.ne.s32.totalorder %s105, %s108
      %p117 = scmp.eq.s32.totalorder %s22, 1
      %p118 = por %p116, %p117
      %p119 = scmp.ne.s32.totalorder %s108, %s109
      %p120 = scmp.eq.s32.totalorder %s22, 0
      %p121 = por %p119, %p120
      %p122 = scmp.ne.s32.totalorder %s108, %s109
      %p123 = scmp.eq.s32.totalorder %s23, 1
      %p124 = por %p122, %p123
      %p126 = scmp.ne.s32.totalorder %s109, %s125
      %p127 = scmp.eq.s32.totalorder %s23, 0
      %p128 = por %p126, %p127
      %s129 = ssub.s32 %s17, %s24
      %p130 = scmp.eq.s32.totalorder %s129, 0
      %s132 = sadd.s32 %s131, 1
      %s133 = scalar_select %p130, %s131, %s132
      %p136 = pneg %p130
      %p137 = scmp.eq.s32.totalorder %s17, 1
      %p138 = por %p136, %p137
      %p139 = scmp.ne.s32.totalorder %s131, %s134
      %p140 = scmp.eq.s32.totalorder %s17, 0
      %p141 = por %p139, %p140
      %p142 = scmp.ne.s32.totalorder %s131, %s134
      %p143 = scmp.eq.s32.totalorder %s22, 1
      %p144 = por %p142, %p143
      %p145 = scmp.ne.s32.totalorder %s134, %s135
      %p146 = scmp.eq.s32.totalorder %s22, 0
      %p147 = por %p145, %p146
      %p148 = scmp.ne.s32.totalorder %s134, %s135
      %p149 = scmp.eq.s32.totalorder %s23, 1
      %p150 = por %p148, %p149
      %p152 = scmp.ne.s32.totalorder %s135, %s151
      %p153 = scmp.eq.s32.totalorder %s23, 0
      %p154 = por %p152, %p153
      %s156 = sadd.s32 %s155, 1
      %p159 = scmp.eq.s32.totalorder %s17, 1
      %p160 = scmp.ne.s32.totalorder %s155, %s157
      %p161 = scmp.eq.s32.totalorder %s17, 0
      %p162 = por %p160, %p161
      %p163 = scmp.ne.s32.totalorder %s155, %s157
      %p164 = scmp.eq.s32.totalorder %s22, 1
      %p165 = por %p163, %p164
      %p166 = scmp.ne.s32.totalorder %s157, %s158
      %p167 = scmp.eq.s32.totalorder %s22, 0
      %p168 = por %p166, %p167
      %p169 = scmp.ne.s32.totalorder %s157, %s158
      %p170 = scmp.eq.s32.totalorder %s23, 1
      %p171 = por %p169, %p170
      %p173 = scmp.ne.s32.totalorder %s158, %s172
      %p174 = scmp.eq.s32.totalorder %s23, 0
      %p175 = por %p173, %p174
      %s177 = sadd.s32 %s176, 1
      %p180 = scmp.eq.s32.totalorder %s17, 1
      %p181 = scmp.ne.s32.totalorder %s176, %s178
      %p182 = scmp.eq.s32.totalorder %s17, 0
      %p183 = por %p181, %p182
      %p184 = scmp.ne.s32.totalorder %s176, %s178
      %p185 = scmp.eq.s32.totalorder %s22, 1
      %p186 = por %p184, %p185
      %p187 = scmp.ne.s32.totalorder %s178, %s179
      %p188 = scmp.eq.s32.totalorder %s22, 0
      %p189 = por %p187, %p188
      %p190 = scmp.ne.s32.totalorder %s178, %s179
      %p191 = scmp.eq.s32.totalorder %s23, 1
      %p192 = por %p190, %p191
      %p194 = scmp.ne.s32.totalorder %s179, %s193
      %p195 = scmp.eq.s32.totalorder %s23, 0
      %p196 = por %p194, %p195
      %s198 = sadd.s32 %s197, 1
      %p201 = scmp.eq.s32.totalorder %s17, 1
      %p202 = scmp.ne.s32.totalorder %s197, %s199
      %p203 = scmp.eq.s32.totalorder %s17, 0
      %p204 = por %p202, %p203
      %p205 = scmp.ne.s32.totalorder %s197, %s199
      %p206 = scmp.eq.s32.totalorder %s22, 1
      %p207 = por %p205, %p206
      %p208 = scmp.ne.s32.totalorder %s199, %s200
      %p209 = scmp.eq.s32.totalorder %s22, 0
      %p210 = por %p208, %p209
      %p211 = scmp.ne.s32.totalorder %s199, %s200
      %p212 = scmp.eq.s32.totalorder %s23, 1
      %p213 = por %p211, %p212
      %p215 = scmp.ne.s32.totalorder %s200, %s214
      %p216 = scmp.eq.s32.totalorder %s23, 0
      %p217 = por %p215, %p216
      %s218 = ssub.s32 %s17, %s24
      %p219 = scmp.eq.s32.totalorder %s218, 0
      %s221 = sadd.s32 %s220, 1
      %s222 = scalar_select %p219, %s220, %s221
      %p225 = pneg %p219
      %p226 = scmp.eq.s32.totalorder %s17, 1
      %p227 = por %p225, %p226
      %p228 = scmp.ne.s32.totalorder %s220, %s223
      %p229 = scmp.eq.s32.totalorder %s17, 0
      %p230 = por %p228, %p229
      %p231 = scmp.ne.s32.totalorder %s220, %s223
      %p232 = scmp.eq.s32.totalorder %s22, 1
      %p233 = por %p231, %p232
      %p234 = scmp.ne.s32.totalorder %s223, %s224
      %p235 = scmp.eq.s32.totalorder %s22, 0
      %p236 = por %p234, %p235
      %p237 = scmp.ne.s32.totalorder %s223, %s224
      %p238 = scmp.eq.s32.totalorder %s23, 1
      %p239 = por %p237, %p238
      %p241 = scmp.ne.s32.totalorder %s224, %s240
      %p242 = scmp.eq.s32.totalorder %s23, 0
      %p243 = por %p241, %p242
      %p244 = scmp.le.s32.totalorder 1, %s17
      %p245 = scmp.lt.s32.totalorder %s17, 3
      %p246 = pnand %p244, %p245
      %p247 = pneg %p246
      // Predicated region
      $region9: #{mamba_block_forward.3} parent=5 // pred_check
        _
      $region10: #{mamba_block_forward.3} parent=5 // pred_check_branch
        %249 = sbr.rel (%p246) target = $region12
      $region11: #{mamba_block_forward.3} parent=5 // pred_region
        %s250 = ssub.s32 %s17, 1
        // Predicated region
        $region13: #{mamba_block_forward.3} parent=11 // pred_check
          %p251 = pneg %p168
        $region14: #{mamba_block_forward.3} parent=11 // pred_check_branch
          %253 = sbr.rel (%p251) target = $region16
        $region15: #{mamba_block_forward.3} parent=11 // pred_region
          _
        $region16: #{mamba_block_forward.3} parent=11 // pred_fallthru
          _
        // Predicated region
        $region17: #{mamba_block_forward.3} parent=11 // pred_check
          %p254 = pneg %p189
        $region18: #{mamba_block_forward.3} parent=11 // pred_check_branch
          %256 = sbr.rel (%p254) target = $region20
        $region19: #{mamba_block_forward.3} parent=11 // pred_region
          _
        $region20: #{mamba_block_forward.3} parent=11 // pred_fallthru
          _
        // Predicated region
        $region21: #{mamba_block_forward.3} parent=11 // pred_check
          %p257 = pneg %p210
        $region22: #{mamba_block_forward.3} parent=11 // pred_check_branch
          %259 = sbr.rel (%p257) target = $region24
        $region23: #{mamba_block_forward.3} parent=11 // pred_region
          _
        $region24: #{mamba_block_forward.3} parent=11 // pred_fallthru
          _
      $region12: #{mamba_block_forward.3} parent=5 // pred_fallthru
        _
      %p260 = scmp.lt.s32.totalorder %s17, 2
      // Predicated region
      $region25: #{mamba_block_forward.3} parent=5 // pred_check
        %p261 = pneg %p260
      $region26: #{mamba_block_forward.3} parent=5 // pred_check_branch
        %263 = sbr.rel (%p261) target = $region28
      $region27: #{mamba_block_forward.3} parent=5 // pred_region
        // Predicated region
        $region29: #{mamba_block_forward.3} parent=27 // pred_check
          %p264 = pneg %p37
        $region30: #{mamba_block_forward.3} parent=27 // pred_check_branch
          %266 = sbr.rel (%p264) target = $region32
        $region31: #{mamba_block_forward.3} parent=27 // pred_region
          %p267 = scmp.lt.s32.totalorder %s17, 1
          %s268 = scalar_select %p267, %s17, 1
          %s269 = smul.addr %s268, 8
          %s270 = scalar_lea.vmem %s0, %s269
        $region32: #{mamba_block_forward.3} parent=27 // pred_fallthru
          _
        // Predicated region
        $region33: #{mamba_block_forward.3} parent=27 // pred_check
          %p271 = pneg %p63
        $region34: #{mamba_block_forward.3} parent=27 // pred_check_branch
          %273 = sbr.rel (%p271) target = $region36
        $region35: #{mamba_block_forward.3} parent=27 // pred_region
          %p274 = scmp.lt.s32.totalorder %s17, 1
          %s275 = scalar_select %p274, %s17, 1
          %s276 = smul.addr %s275, 8
          %s277 = scalar_lea.vmem %s1, %s276
        $region36: #{mamba_block_forward.3} parent=27 // pred_fallthru
          _
        // Predicated region
        $region37: #{mamba_block_forward.3} parent=27 // pred_check
          %p278 = pneg %p89
        $region38: #{mamba_block_forward.3} parent=27 // pred_check_branch
          %280 = sbr.rel (%p278) target = $region40
        $region39: #{mamba_block_forward.3} parent=27 // pred_region
          %p281 = scmp.lt.s32.totalorder %s17, 1
          %s282 = scalar_select %p281, %s17, 1
          %s283 = smul.addr %s282, 8
          %s284 = scalar_lea.vmem %s2, %s283
        $region40: #{mamba_block_forward.3} parent=27 // pred_fallthru
          _
        // Predicated region
        $region41: #{mamba_block_forward.3} parent=27 // pred_check
          %p285 = pneg %p115
        $region42: #{mamba_block_forward.3} parent=27 // pred_check_branch
          %287 = sbr.rel (%p285) target = $region44
        $region43: #{mamba_block_forward.3} parent=27 // pred_region
          %p288 = scmp.lt.s32.totalorder %s17, 1
          %s289 = scalar_select %p288, %s17, 1
          %s290 = smul.addr %s289, 16
          %s291 = smul.addr %s290, 8
          %s292 = scalar_lea.vmem %s3, %s291
        $region44: #{mamba_block_forward.3} parent=27 // pred_fallthru
          _
        // Predicated region
        $region45: #{mamba_block_forward.3} parent=27 // pred_check
          %p293 = pneg %p141
        $region46: #{mamba_block_forward.3} parent=27 // pred_check_branch
          %295 = sbr.rel (%p293) target = $region48
        $region47: #{mamba_block_forward.3} parent=27 // pred_region
          %p296 = scmp.lt.s32.totalorder %s17, 1
          %s297 = scalar_select %p296, %s17, 1
          %s298 = smul.addr %s297, 8
          %s299 = scalar_lea.vmem %s4, %s298
        $region48: #{mamba_block_forward.3} parent=27 // pred_fallthru
          _
      $region28: #{mamba_block_forward.3} parent=5 // pred_fallthru
        _
      %p300 = scmp.le.s32.totalorder 1, %s17
      %p301 = scmp.lt.s32.totalorder %s17, 3
      %p302 = pnand %p300, %p301
      %p303 = pneg %p302
      // Predicated region
      $region49: #{mamba_block_forward.3} parent=5 // pred_check
        _
      $region50: #{mamba_block_forward.3} parent=5 // pred_check_branch
        %305 = sbr.rel (%p302) target = $region52
      $region51: #{mamba_block_forward.3} parent=5 // pred_region
        %s306 = ssub.s32 %s17, 1
        %p307 = scmp.lt.s32.totalorder %s22, 1
        %s308 = scalar_select %p307, %s22, 1
        %s309 = smul.addr %s308, 8
        %s310 = scalar_lea.vmem %s0, %s309
        %p311 = pneg %p43
        %p312 = pneg %p40
        %p313 = scmp.lt.s32.totalorder %s22, 1
        %s314 = scalar_select %p313, %s22, 1
        %s315 = smul.addr %s314, 8
        %s316 = scalar_lea.vmem %s1, %s315
        %p317 = pneg %p69
        %p318 = pneg %p66
        %p319 = scmp.lt.s32.totalorder %s22, 1
        %s320 = scalar_select %p319, %s22, 1
        %s321 = smul.addr %s320, 8
        %s322 = scalar_lea.vmem %s2, %s321
        %p323 = pneg %p95
        %p324 = pneg %p92
        %p325 = scmp.lt.s32.totalorder %s22, 1
        %s326 = scalar_select %p325, %s22, 1
        %s327 = smul.addr %s326, 16
        %s328 = smul.addr %s327, 8
        %s329 = scalar_lea.vmem %s3, %s328
        %p330 = pneg %p121
        %p331 = pneg %p118
        %p332 = scmp.lt.s32.totalorder %s22, 1
        %s333 = scalar_select %p332, %s22, 1
        %s334 = smul.addr %s333, 8
        %s335 = scalar_lea.vmem %s4, %s334
        %p336 = pneg %p147
        %p337 = pneg %p144
        %p338 = pneg %p168
        %p339 = pneg %p165
        %p340 = pneg %p189
        %p341 = pneg %p186
        %p342 = pneg %p210
        %p343 = pneg %p207
        %p344 = pneg %p236
        %p345 = pneg %p233
        %s346 = sand.u32 %s223, 1
        %s347 = scalar_lea.sflag [#allocation5], %s346
        %s348 = sand.u32 %s223, 1
        %s349 = smul.addr %s348, 8
        %s350 = scalar_lea.vmem [#allocation4], %s349
        %p351 = scmp.lt.s32.totalorder %s22, 1
        %s352 = scalar_select %p351, %s22, 1
        %s353 = smul.addr %s352, 8
        %s354 = scalar_lea.vmem %s0, %s353
        %p355 = scmp.lt.s32.totalorder %s22, 1
        %s356 = scalar_select %p355, %s22, 1
        %s357 = smul.addr %s356, 8
        %s358 = scalar_lea.vmem %s1, %s357
        %p359 = scmp.lt.s32.totalorder %s22, 1
        %s360 = scalar_select %p359, %s22, 1
        %s361 = smul.addr %s360, 8
        %s362 = scalar_lea.vmem %s2, %s361
        %p363 = scmp.lt.s32.totalorder %s22, 1
        %s364 = scalar_select %p363, %s22, 1
        %s365 = smul.addr %s364, 16
        %s366 = smul.addr %s365, 8
        %s367 = scalar_lea.vmem %s3, %s366
        %p368 = scmp.lt.s32.totalorder %s22, 1
        %s369 = scalar_select %p368, %s22, 1
        %s370 = smul.addr %s369, 8
        %s371 = scalar_lea.vmem %s4, %s370
        %v372 = vld [vmem:[%s5] sm:$0xff]
        %v373 = vld [vmem:[%s5 + $0x8] sm:$0xff]
        %v374 = vsub.f32 0.0, %v372
        %v375 = vsub.f32 0.0, %v373
        %v376 = vmul.f32 %v374, 1.442695
        %v377 = vpow.pop %v376
        %v378 = vmul.f32 %v375, 1.442695
        %v379 = vpow.pop %v378
        %v380 = vld [vmem:[%s6] sm:$0x1]
        %vm381 = vcmask 261120
        %382 = vst.msk [vmem:[#allocation2] sm:$0xff] %vm381, 0.0
        %383 = vst.msk [vmem:[#allocation2 + $0x8] sm:$0xff] %vm381, 0.0
        loop: start=0, step=1, limit=8
        $region53: #{mamba_block_forward.3} parent=51 // loop_pre_header
          _
        $region54: #{mamba_block_forward.3} parent=51 // loop_header
          %s385 = sphi 0, %s389
          %p386 = scmp.ge.s32.totalorder %s385, 8
        $region55: #{mamba_block_forward.3} parent=51 // loop_header_branch
          %388 = sbr.rel (%p386) target = $region59
        $region56: #{mamba_block_forward.3} parent=51 // loop_body
          %s390 = scalar_lea.vmem %s362, %s385
          %v391 = vld [vmem:[%s390] sm:$0x1]
          %s392 = scalar_lea.vmem %s354, %s385
          %v393 = vld [vmem:[%s392] sm:$0x1]
          %s394 = scalar_lea.vmem %s371, %s385
          %v395 = vld [vmem:[%s394] sm:$0x1]
          %s396 = smul.u32 %s385, 16
          %s397 = scalar_lea.vmem %s367, %s396
          %v398 = vld [vmem:[%s397] sm:$0xff]
          %v399 = vld [vmem:[%s397 + $0x8] sm:$0xff]
          %v400 = vlaneseq
          %v401 = vshrl.u32 %v400, 7
          %v402 = vsub.s32 0, %v401
          %v403 = vrot.slane %v391, %v402
          %v404 = vmul.f32 %v377, %v403
          %v405 = vmul.f32 %v379, %v403
          %v406 = vmul.f32 %v391, %v393
          %408 = vset.pattern.permute.xlu0 0
          %409 = vperm.xlu0 %408, %v398
          %v410 = vpop.permute.xlu0 %409
          %413 = vset.pattern.permute.xlu0 0
          %414 = vperm.xlu0 %413, %v399
          %v415 = vpop.permute.xlu0 %414
          %v417 = vlaneseq
          %v418 = vshrl.u32 %v417, 7
          %v419 = vsub.s32 0, %v418
          %v420 = vrot.slane %v406, %v419
          %v421 = vmul.f32 %v410, %v420
          %v422 = vmul.f32 %v415, %v420
          %v423 = vld [vmem:[#allocation2] sm:$0xff]
          %v424 = vld [vmem:[#allocation2 + $0x8] sm:$0xff]
          %v425 = vmul.f32 %v404, %v423
          %v426 = vmul.f32 %v405, %v424
          %v427 = vadd.f32 %v425, %v421
          %v428 = vadd.f32 %v426, %v422
          %429 = vst.msk [vmem:[#allocation2] sm:$0xff] %vm381, %v427
          %430 = vst.msk [vmem:[#allocation2 + $0x8] sm:$0xff] %vm381, %v428
          %v431 = vmul.f32 %v380, %v393
          %vm432 = vcmask 130048
          %v434 = vsel %vm432, %v395, 0
          %436 = vmatprep.subr.mxu0 0.0
          %437 = vmatpush1.msra.mxu0 0.0
          %438 = vmatprep.subr.mxu0 0.0
          %439 = vmatpush1.msra.mxu0 0.0
          %440 = vmatprep.subr.mxu0 0.0
          %441 = vmatpush1.msra.mxu0 0.0
          %442 = vmatprep.subr.mxu0 0.0
          %443 = vmatpush1.msra.mxu0 0.0
          %444 = vmatprep.subr.mxu0 0.0
          %445 = vmatpush1.msra.mxu0 0.0
          %446 = vmatprep.subr.mxu0 0.0
          %447 = vmatpush1.msra.mxu0 0.0
          %448 = vmatprep.subr.mxu0 0.0
          %449 = vmatpush1.msra.mxu0 0.0
          %450 = vmatprep.subr.mxu0 0.0
          %451 = vmatpush1.msra.mxu0 0.0
          %452 = vmatprep.subr.mxu0 0.0
          %453 = vmatpush1.msra.mxu0 0.0
          %454 = vmatprep.subr.mxu0 0.0
          %455 = vmatpush1.msra.mxu0 0.0
          %456 = vmatprep.subr.mxu0 0.0
          %457 = vmatpush1.msra.mxu0 0.0
          %458 = vmatprep.subr.mxu0 0.0
          %459 = vmatpush1.msra.mxu0 0.0
          %460 = vmatprep.subr.mxu0 0.0
          %461 = vmatpush1.msra.mxu0 0.0
          %462 = vmatprep.subr.mxu0 0.0
          %463 = vmatpush1.msra.mxu0 0.0
          %464 = vmatprep.subr.mxu0 0.0
          %465 = vmatpush1.msra.mxu0 %v428
          %466 = vmatprep.subr.mxu0 0.0
          %467 = vmatpush1.msra.mxu0 %v427
          %468 = vmatprep.subr.mxu0 0.0
          %469 = vmatpush2.msra.mxu0 0.0
          %470 = vmatprep.subr.mxu0 0.0
          %471 = vmatpush2.msra.mxu0 0.0
          %472 = vmatprep.subr.mxu0 0.0
          %473 = vmatpush2.msra.mxu0 0.0
          %474 = vmatprep.subr.mxu0 0.0
          %475 = vmatpush2.msra.mxu0 0.0
          %476 = vmatprep.subr.mxu0 0.0
          %477 = vmatpush2.msra.mxu0 0.0
          %478 = vmatprep.subr.mxu0 0.0
          %479 = vmatpush2.msra.mxu0 0.0
          %480 = vmatprep.subr.mxu0 0.0
          %481 = vmatpush2.msra.mxu0 0.0
          %482 = vmatprep.subr.mxu0 0.0
          %483 = vmatpush2.msra.mxu0 0.0
          %484 = vmatprep.subr.mxu0 0.0
          %485 = vmatpush2.msra.mxu0 0.0
          %486 = vmatprep.subr.mxu0 0.0
          %487 = vmatpush2.msra.mxu0 0.0
          %488 = vmatprep.subr.mxu0 0.0
          %489 = vmatpush2.msra.mxu0 0.0
          %490 = vmatprep.subr.mxu0 0.0
          %491 = vmatpush2.msra.mxu0 0.0
          %492 = vmatprep.subr.mxu0 0.0
          %493 = vmatpush2.msra.mxu0 0.0
          %494 = vmatprep.subr.mxu0 0.0
          %495 = vmatpush2.msra.mxu0 0.0
          %496 = vmatprep.subr.mxu0 0.0
          %497 = vmatpush2.msra.mxu0 0.0
          %498 = vmatprep.subr.mxu0 0.0
          %499 = vmatpush2.msra.mxu0 0.0
          %500 = vmatprep.mubr.f32.mxu0 0.0
          %501 = vmatmul.mubr.f32.gmra.mxu0 %v434
          %v502 = vpop.f32.mrf.mxu0
          %v503 = vadd.f32 %v431, %v502
          %v504 = vpop.f32.mrf.mxu0
          %505 = vdwg.mxu0
          %s506 = scalar_lea.vmem [#allocation3], %s385
          %vm507 = vcmask 253952
          %508 = vst.msk [vmem:[%s506] sm:$0x1] %vm507, %v503
        $region57: #{mamba_block_forward.3} parent=51 // loop_footer
          %s389 = sadd.s32 1, %s385
        $region58: #{mamba_block_forward.3} parent=51 // loop_footer_branch
          %384 = sbr.rel target = $region54
        $region59: #{mamba_block_forward.3} parent=51 // loop_exit
          _
        %v509 = vld [vmem:[#allocation3] sm:$0xff]
        %v510 = vld [vmem:[%s358] sm:$0xff]
        %v511 = vmul.f32 %v509, %v510
        %v512 = vld [vmem:[%s7] sm:$0xff]
        %v513 = vld [vmem:[%s7 + $0x8] sm:$0xff]
        %v514 = vld [vmem:[%s7 + $0x10] sm:$0xff]
        %v515 = vld [vmem:[%s7 + $0x18] sm:$0xff]
        %v517 = vsel %vm381, %v511, 0
        %519 = vmatprep.subr.mxu0 0.0
        %520 = vmatpush1.msra.mxu0 0.0
        %521 = vmatprep.subr.mxu0 0.0
        %522 = vmatpush1.msra.mxu0 0.0
        %523 = vmatprep.subr.mxu0 0.0
        %524 = vmatpush1.msra.mxu0 0.0
        %525 = vmatprep.subr.mxu0 0.0
        %526 = vmatpush1.msra.mxu0 0.0
        %527 = vmatprep.subr.mxu0 0.0
        %528 = vmatpush1.msra.mxu0 0.0
        %529 = vmatprep.subr.mxu0 0.0
        %530 = vmatpush1.msra.mxu0 0.0
        %531 = vmatprep.subr.mxu0 0.0
        %532 = vmatpush1.msra.mxu0 0.0
        %533 = vmatprep.subr.mxu0 0.0
        %534 = vmatpush1.msra.mxu0 0.0
        %535 = vmatprep.subr.mxu0 0.0
        %536 = vmatpush1.msra.mxu0 0.0
        %537 = vmatprep.subr.mxu0 0.0
        %538 = vmatpush1.msra.mxu0 0.0
        %539 = vmatprep.subr.mxu0 0.0
        %540 = vmatpush1.msra.mxu0 0.0
        %541 = vmatprep.subr.mxu0 0.0
        %542 = vmatpush1.msra.mxu0 0.0
        %543 = vmatprep.subr.mxu0 0.0
        %544 = vmatpush1.msra.mxu0 %v515
        %545 = vmatprep.subr.mxu0 0.0
        %546 = vmatpush1.msra.mxu0 %v514
        %547 = vmatprep.subr.mxu0 0.0
        %548 = vmatpush1.msra.mxu0 %v513
        %549 = vmatprep.subr.mxu0 0.0
        %550 = vmatpush1.msra.mxu0 %v512
        %551 = vmatprep.subr.mxu0 0.0
        %552 = vmatpush2.msra.mxu0 0.0
        %553 = vmatprep.subr.mxu0 0.0
        %554 = vmatpush2.msra.mxu0 0.0
        %555 = vmatprep.subr.mxu0 0.0
        %556 = vmatpush2.msra.mxu0 0.0
        %557 = vmatprep.subr.mxu0 0.0
        %558 = vmatpush2.msra.mxu0 0.0
        %559 = vmatprep.subr.mxu0 0.0
        %560 = vmatpush2.msra.mxu0 0.0
        %561 = vmatprep.subr.mxu0 0.0
        %562 = vmatpush2.msra.mxu0 0.0
        %563 = vmatprep.subr.mxu0 0.0
        %564 = vmatpush2.msra.mxu0 0.0
        %565 = vmatprep.subr.mxu0 0.0
        %566 = vmatpush2.msra.mxu0 0.0
        %567 = vmatprep.subr.mxu0 0.0
        %568 = vmatpush2.msra.mxu0 0.0
        %569 = vmatprep.subr.mxu0 0.0
        %570 = vmatpush2.msra.mxu0 0.0
        %571 = vmatprep.subr.mxu0 0.0
        %572 = vmatpush2.msra.mxu0 0.0
        %573 = vmatprep.subr.mxu0 0.0
        %574 = vmatpush2.msra.mxu0 0.0
        %575 = vmatprep.subr.mxu0 0.0
        %576 = vmatpush2.msra.mxu0 0.0
        %577 = vmatprep.subr.mxu0 0.0
        %578 = vmatpush2.msra.mxu0 0.0
        %579 = vmatprep.subr.mxu0 0.0
        %580 = vmatpush2.msra.mxu0 0.0
        %581 = vmatprep.subr.mxu0 0.0
        %582 = vmatpush2.msra.mxu0 0.0
        %583 = vmatprep.mubr.f32.mxu0 0.0
        %584 = vmatmul.mubr.f32.gmra.mxu0 %v517
        %v585 = vpop.f32.mrf.mxu0
        %v586 = vadd.f32 0.0, %v585
        %v587 = vpop.f32.mrf.mxu0
        %588 = vdwg.mxu0
        %589 = vst.msk [vmem:[%s350] sm:$0xff] %vm381, %v586
        %s590 = sand.u32 %s223, 1
        %s591 = scalar_lea.sflag [#allocation5], %s590
        %s592 = sand.u32 %s223, 1
        %s593 = smul.addr %s592, 8
        %s594 = scalar_lea.vmem [#allocation4], %s593
        // Predicated region
        $region60: #{mamba_block_forward.3} parent=51 // pred_check
          %p595 = pneg %p233
        $region61: #{mamba_block_forward.3} parent=51 // pred_check_branch
          %597 = sbr.rel (%p595) target = $region63
        $region62: #{mamba_block_forward.3} parent=51 // pred_region
          %s599 = ssub.s32 128, 128
          %600 = vsyncadd %s591, %s599
          %s601 = smul.addr %s22, 128
          %s602 = scalar_lea.hbm %s8, %s601
          %s604 = sshll.u32 %s594, 4
          %s605 = int_to_ptr.vmem [resolvable:$true] %s604
          %607 = dma.vmem_to_hbm [thread:$0]  %s605, 128, %s602, %s591
        $region63: #{mamba_block_forward.3} parent=51 // pred_fallthru
          _
      $region52: #{mamba_block_forward.3} parent=5 // pred_fallthru
        _
      %p608 = scmp.le.s32.totalorder 2, %s17
      // Predicated region
      $region64: #{mamba_block_forward.3} parent=5 // pred_check
        %p609 = pneg %p608
      $region65: #{mamba_block_forward.3} parent=5 // pred_check_branch
        %611 = sbr.rel (%p609) target = $region67
      $region66: #{mamba_block_forward.3} parent=5 // pred_region
        %s612 = ssub.s32 %s17, 2
        // Predicated region
        $region68: #{mamba_block_forward.3} parent=66 // pred_check
          %p613 = pneg %p239
        $region69: #{mamba_block_forward.3} parent=66 // pred_check_branch
          %615 = sbr.rel (%p613) target = $region71
        $region70: #{mamba_block_forward.3} parent=66 // pred_region
          %s616 = sand.u32 %s224, 1
          %s617 = scalar_lea.sflag [#allocation5], %s616
          %s618 = sand.u32 %s224, 1
          %s619 = smul.addr %s618, 8
          %s620 = scalar_lea.vmem [#allocation4], %s619
          %621 = dma.done %s617, 128
        $region71: #{mamba_block_forward.3} parent=66 // pred_fallthru
          _
      $region67: #{mamba_block_forward.3} parent=5 // pred_fallthru
        _
    $region6: #{mamba_block_forward.3} parent=1 // loop_footer
      %s21 = sadd.s32 1, %s17
    $region7: #{mamba_block_forward.3} parent=1 // loop_footer_branch
      %16 = sbr.rel target = $region3
    $region8: #{mamba_block_forward.3} parent=1 // loop_exit
      _
    %622 = vsyncpa [#allocation5], 1
    %s623 = scalar_lea.sflag [#allocation5], 1
    %624 = vsyncpa %s623, 1

</llo_original>
